<compile_context>
chip_gen: v7x
topology: tpu7x:2x2x1
jax: 0.10.0
libtpu: 0.0.40
codegen_flags: <defaults>
</compile_context>

<pallas_src>
import jax
import jax.numpy as jnp
from jax.experimental import pallas as pl
from jax.experimental.pallas import tpu as pltpu

# Standard 3DGS spherical-harmonics constants (eval_sh).
C0 = 0.28209479177387814
C1 = 0.4886025119029199
C2 = (1.0925484305920792, -1.0925484305920792, 0.31539156525252005,
      -1.0925484305920792, 0.5462742152960396)
C3 = (-0.5900435899266435, 2.890611442640554, -0.4570457994644658,
      0.3731763325901154, -0.4570457994644658, 1.445305721320277,
      -0.5900435899266435)

_LANES = 128


# ----------------------------- kernel bodies --------------------------------
def _make_sh2rgb_kernel(active_sh_degree: int, cano_view_dir: bool,
                        approx_recip: bool):
    f32 = jnp.float32

    if active_sh_degree == 0:
        # Degree-0 fast path: only the DC coefficient matters; direction unused.
        def kernel0(sh_ref, out_ref):
            for c in range(3):
                out_ref[c] = jnp.maximum(C0 * sh_ref[c, 0].astype(f32) + 0.5, 0.0)
        return kernel0

    def kernel(cam_ref, xyz_ref, *rest):
        if cano_view_dir:
            r_ref, sh_ref, out_ref = rest
        else:
            sh_ref, out_ref = rest

        # camera center: three scalars from SMEM, broadcast over (tile_r, 128).
        d0 = xyz_ref[0] - cam_ref[0]
        d1 = xyz_ref[1] - cam_ref[1]
        d2 = xyz_ref[2] - cam_ref[2]

        if cano_view_dir:
            # dir' = R_bwd @ dir with R_bwd = T_fwd[:, :3, :3]^T
            #   =>  dir'_i = sum_j R[j, i] * d_j
            e0 = r_ref[0, 0] * d0 + r_ref[1, 0] * d1 + r_ref[2, 0] * d2
            e1 = r_ref[0, 1] * d0 + r_ref[1, 1] * d1 + r_ref[2, 1] * d2
            e2 = r_ref[0, 2] * d0 + r_ref[1, 2] * d1 + r_ref[2, 2] * d2
            d0, d1, d2 = e0, e1, e2
            # TODO(synk): training-time view_noise rotation (augm_rots) is not
            # applied (module implemented with eval semantics).

        # dir / (||dir|| + 1e-12): one sqrt + one (EUP) reciprocal + 3 muls.
        norm = jnp.sqrt(d0 * d0 + d1 * d1 + d2 * d2)
        inv = pl.reciprocal(norm + 1e-12, approx=approx_recip)
        x = d0 * inv
        y = d1 * inv
        z = d2 * inv

        # Direction-dependent SH basis, shared by the three color channels.
        basis = [(-C1) * y, C1 * z, (-C1) * x]
        if active_sh_degree > 1:
            xx, yy, zz = x * x, y * y, z * z
            xy, yz, xz = x * y, y * z, x * z
            basis += [C2[0] * xy,
                      C2[1] * yz,
                      C2[2] * (2.0 * zz - xx - yy),
                      C2[3] * xz,
                      C2[4] * (xx - yy)]
            if active_sh_degree > 2:
                basis += [C3[0] * y * (3.0 * xx - yy),
                          C3[1] * xy * z,
                          C3[2] * y * (4.0 * zz - xx - yy),
                          C3[3] * z * (2.0 * zz - 3.0 * xx - 3.0 * yy),
                          C3[4] * x * (4.0 * zz - xx - yy),
                          C3[5] * z * (xx - yy),
                          C3[6] * x * (xx - 3.0 * yy)]

        for c in range(3):
            res = C0 * sh_ref[c, 0].astype(f32)
            for k, b in enumerate(basis):
                res = res + b * sh_ref[c, k + 1].astype(f32)
            # colors_precomp = clamp_min(sh2rgb + 0.5, 0.0)
            out_ref[c] = jnp.maximum(res + 0.5, 0.0)

    return kernel


# ----------------------------- prepack (cacheable) ---------------------------
def prepack_sh2rgb_inputs(xyz, features, T_fwd=None, *, active_sh_degree: int,
                          cano_view_dir: bool = True, tile_rows: int = 256,
                          feature_dtype=jnp.bfloat16):
    """Channel-major, vreg-dense relayout of the per-gaussian streams.

    This is the expensive pad+transpose pass; cache its result across frames
    (xyz / features / T_fwd are static in 3DGS inference) so the kernel itself
    stays at its HBM roofline.
    """
    f32 = jnp.float32
    N = xyz.shape[0]
    K_act = (active_sh_degree + 1) ** 2
    assert features.shape[1] >= K_act, "features has fewer SH coeffs than active degree needs"
    sh_dt = f32 if feature_dtype is None else feature_dtype
    sh_bytes = jnp.dtype(sh_dt).itemsize

    # Gaussian axis -> (rows, 128), rows grouped into tiles of tile_r sublanes.
    nb = -(-N // _LANES)
    tile_r = max(8, min(int(tile_rows), ((nb + 7) // 8) * 8))
    tile_r = ((tile_r + 7) // 8) * 8
    if nb > 8:
        # Keep >= 2 grid steps so both v7x TensorCores get work.
        half = ((-(-nb // 2) + 7) // 8) * 8
        tile_r = min(tile_r, half)

    # VMEM budget: double-buffered input+output blocks must stay well under the
    # smallest physical VMEM (v7x: 64 MiB).  40 MiB block budget + headroom.
    row_bytes = 3 * K_act * _LANES * sh_bytes + 3 * _LANES * 4          # SH + out
    if active_sh_degree > 0:
        row_bytes += 3 * _LANES * 4                                      # xyz
        if cano_view_dir:
            row_bytes += 9 * _LANES * 4                                  # R
    budget = 40 << 20
    while tile_r > 8 and 2 * row_bytes * tile_r > budget:
        tile_r = max(8, ((tile_r // 2) // 8) * 8)
    vmem_limit = int(min(max(2 * row_bytes * tile_r + (8 << 20), 24 << 20), 56 << 20))

    nb_pad = -(-nb // tile_r) * tile_r
    Np = nb_pad * _LANES
    pad = Np - N

    # SH stream: slice to active degree, pad, channel-major, optional bf16.
    feat = jnp.asarray(features, f32)[:, :K_act, :]
    feat_p = jnp.pad(feat, ((0, pad), (0, 0), (0, 0)))
    sh_l = jnp.transpose(feat_p, (2, 1, 0)).reshape(3, K_act, nb_pad, _LANES).astype(sh_dt)

    packed = {
        "N": N, "K_act": K_act, "tile_r": tile_r, "nb_pad": nb_pad,
        "active_sh_degree": active_sh_degree, "cano_view_dir": cano_view_dir,
        "vmem_limit_bytes": vmem_limit,
        "approx_recip": (sh_dt != f32),   # keep exact 1/(norm+eps) on the f32 path
        "sh": sh_l, "xyz": None, "R": None,
    }
    if active_sh_degree > 0:
        xyz_p = jnp.pad(jnp.asarray(xyz, f32), ((0, pad), (0, 0)))
        packed["xyz"] = xyz_p.T.reshape(3, nb_pad, _LANES)
        if cano_view_dir:
            R_p = jnp.pad(jnp.asarray(T_fwd, f32)[:, :3, :3],
                          ((0, pad), (0, 0), (0, 0)))
            packed["R"] = jnp.transpose(R_p, (1, 2, 0)).reshape(3, 3, nb_pad, _LANES)
    return packed


# ----------------------------- pallas_call wrapper ---------------------------
def sh2rgb_pallas_prepacked(packed, camera_center, *, return_channel_major=False):
    f32 = jnp.float32
    deg = packed["active_sh_degree"]
    cano = packed["cano_view_dir"]
    tile_r = packed["tile_r"]
    nb_pad = packed["nb_pad"]
    K_act = packed["K_act"]
    N = packed["N"]

    in_specs, args = [], []
    if deg > 0:
        cam = jnp.asarray(camera_center, f32).reshape(3)
        in_specs.append(pl.BlockSpec(memory_space=pltpu.MemorySpace.SMEM))     # camera (3,)
        args.append(cam)
        in_specs.append(pl.BlockSpec((3, tile_r, _LANES), lambda i: (0, i, 0)))  # xyz
        args.append(packed["xyz"])
        if cano:
            in_specs.append(pl.BlockSpec((3, 3, tile_r, _LANES),
                                         lambda i: (0, 0, i, 0)))               # R
            args.append(packed["R"])
    in_specs.append(pl.BlockSpec((3, K_act, tile_r, _LANES),
                                 lambda i: (0, 0, i, 0)))                        # SH
    args.append(packed["sh"])

    kernel = _make_sh2rgb_kernel(deg, cano, packed["approx_recip"])

    out = pl.pallas_call(
        kernel,
        out_shape=jax.ShapeDtypeStruct((3, nb_pad, _LANES), f32),
        grid=(nb_pad // tile_r,),
        in_specs=in_specs,
        out_specs=pl.BlockSpec((3, tile_r, _LANES), lambda i: (0, i, 0)),
        compiler_params=pltpu.CompilerParams(
            dimension_semantics=("parallel",),
            vmem_limit_bytes=packed["vmem_limit_bytes"]),
    )(*args)

    if return_channel_major:
        return out.reshape(3, nb_pad * _LANES)[:, :N]     # (3, N), no transpose pass
    return out.reshape(3, nb_pad * _LANES).T[:N]          # (N, 3)


def sh2rgb_pallas(xyz, camera_center, T_fwd, features, *, active_sh_degree: int,
                  cano_view_dir: bool = True, tile_rows: int = 256,
                  feature_dtype=jnp.bfloat16, return_channel_major: bool = False):
    """One-shot convenience wrapper (prepack + kernel). For repeated frames,
    call `prepack_sh2rgb_inputs` once and `sh2rgb_pallas_prepacked` per frame."""
    packed = prepack_sh2rgb_inputs(xyz, features, T_fwd,
                                   active_sh_degree=active_sh_degree,
                                   cano_view_dir=cano_view_dir,
                                   tile_rows=tile_rows,
                                   feature_dtype=feature_dtype)
    return sh2rgb_pallas_prepacked(packed, camera_center,
                                   return_channel_major=return_channel_major)


# ---------------- pure-JAX reference (mirrors the PyTorch code) -------------
def _eval_sh_ref(deg, sh, dirs):
    # sh: (N, 3, K), dirs: (N, 3)
    result = C0 * sh[..., 0]
    if deg > 0:
        x, y, z = dirs[..., 0:1], dirs[..., 1:2], dirs[..., 2:3]
        result = result - C1 * y * sh[..., 1] + C1 * z * sh[..., 2] - C1 * x * sh[..., 3]
        if deg > 1:
            xx, yy, zz = x * x, y * y, z * z
            xy, yz, xz = x * y, y * z, x * z
            result = (result + C2[0] * xy * sh[..., 4] + C2[1] * yz * sh[..., 5]
                      + C2[2] * (2.0 * zz - xx - yy) * sh[..., 6]
                      + C2[3] * xz * sh[..., 7] + C2[4] * (xx - yy) * sh[..., 8])
            if deg > 2:
                result = (result
                          + C3[0] * y * (3 * xx - yy) * sh[..., 9]
                          + C3[1] * xy * z * sh[..., 10]
                          + C3[2] * y * (4 * zz - xx - yy) * sh[..., 11]
                          + C3[3] * z * (2 * zz - 3 * xx - 3 * yy) * sh[..., 12]
                          + C3[4] * x * (4 * zz - xx - yy) * sh[..., 13]
                          + C3[5] * z * (xx - yy) * sh[..., 14]
                          + C3[6] * x * (xx - 3 * yy) * sh[..., 15])
    return result


def _sh2rgb_ref(xyz, cam, T_fwd, features, active_sh_degree, cano_view_dir):
    shs_view = jnp.transpose(features, (0, 2, 1))                 # (N, 3, K)
    dir_pp = xyz - cam[None, :]
    if cano_view_dir:
        R_bwd = jnp.transpose(T_fwd[:, :3, :3], (0, 2, 1))
        dir_pp = jnp.einsum("nij,nj->ni", R_bwd, dir_pp)
    dir_n = dir_pp / (jnp.linalg.norm(dir_pp, axis=1, keepdims=True) + 1e-12)
    sh2rgb = _eval_sh_ref(active_sh_degree, shs_view, dir_n)
    return jnp.maximum(sh2rgb + 0.5, 0.0)


if __name__ == "__main__":
    key = jax.random.PRNGKey(0)
    k1, k2, k3, k4 = jax.random.split(key, 4)

    N = 2500                      # deliberately NOT a multiple of 128 -> tests padding
    max_sh_degree = 3
    K = (max_sh_degree + 1) ** 2  # 16 SH coefficients

    xyz = jax.random.normal(k1, (N, 3), jnp.float32)
    camera_center = jax.random.normal(k2, (3,), jnp.float32)
    features = 0.1 * jax.random.normal(k3, (N, K, 3), jnp.float32)
    # Synthetic per-gaussian forward transforms (only the 3x3 rotation block is used).
    T_fwd = jax.random.normal(k4, (N, 4, 4), jnp.float32)

    # 1) f32 SH, cano_view_dir=True, degree 3, multi-step grid, exact tolerance.
    ref3 = _sh2rgb_ref(xyz, camera_center, T_fwd, features, 3, True)
    colors = sh2rgb_pallas(xyz, camera_center, T_fwd, features,
                           active_sh_degree=3, cano_view_dir=True,
                           tile_rows=64, feature_dtype=jnp.float32)
    colors = jax.block_until_ready(colors)
    assert colors.shape == (N, 3)
    assert jnp.allclose(colors, ref3, atol=1e-5, rtol=1e-5)

    # 2) Default bf16 SH + cached prepack + channel-major output (no final transpose).
    packed = prepack_sh2rgb_inputs(xyz, features, T_fwd, active_sh_degree=3,
                                   cano_view_dir=True)           # cache across frames
    colors_cm = sh2rgb_pallas_prepacked(packed, camera_center, return_channel_major=True)
    colors_cm = jax.block_until_ready(colors_cm)
    assert colors_cm.shape == (3, N)
    assert jnp.allclose(colors_cm.T, ref3, atol=2e-2, rtol=0)     # bf16-SH tolerance

    # 3) Degree-0 fast path (only DC coefficient DMA'd; no xyz / R / camera stream).
    ref0 = _sh2rgb_ref(xyz, camera_center, T_fwd, features, 0, True)
    colors0 = sh2rgb_pallas(xyz, camera_center, T_fwd, features, active_sh_degree=0,
                            cano_view_dir=True, feature_dtype=jnp.float32)
    colors0 = jax.block_until_ready(colors0)
    assert jnp.allclose(colors0, ref0, atol=1e-5, rtol=1e-5)

    # 4) cano_view_dir=False, degree 1 (rotation stream dropped; SH sliced 16 -> 4).
    ref1 = _sh2rgb_ref(xyz, camera_center, T_fwd, features, 1, False)
    colors1 = sh2rgb_pallas(xyz, camera_center, T_fwd, features, active_sh_degree=1,
                            cano_view_dir=False, feature_dtype=jnp.float32)
    colors1 = jax.block_until_ready(colors1)
    assert jnp.allclose(colors1, ref1, atol=1e-5, rtol=1e-5)

    print("KERNEL_OK")
</pallas_src>

<mosaic_0001>
module attributes {stable_mosaic.version = 11 : i64} {
  func.func @kernel(%arg0: i32, %arg1: memref<3xf32, #tpu.memory_space<smem>>, %arg2: memref<3x16x128xf32, #tpu.memory_space<vmem>>, %arg3: memref<3x3x16x128xf32, #tpu.memory_space<vmem>>, %arg4: memref<3x16x16x128xf32, #tpu.memory_space<vmem>>, %arg5: memref<3x16x128xf32, #tpu.memory_space<vmem>>) attributes {dimension_semantics = [#tpu.dimension_semantics<parallel>], iteration_bounds = array<i64: 2>, scalar_prefetch = 0 : i64, scratch_operands = 0 : i64, tpu.core_type = #tpu.core_type<tc>, window_params = [{transform_indices = @transform_0, window_bounds = array<i64: 3>}, {transform_indices = @transform_1, window_bounds = array<i64: 3, 16, 128>}, {transform_indices = @transform_2, window_bounds = array<i64: 3, 3, 16, 128>}, {transform_indices = @transform_3, window_bounds = array<i64: 3, 16, 16, 128>}, {transform_indices = @transform_4, window_bounds = array<i64: 3, 16, 128>}]} {
    %c0 = arith.constant 0 : index
    %c0_0 = arith.constant 0 : index
    %c0_1 = arith.constant 0 : index
    %0 = vector.load %arg2[%c0, %c0_0, %c0_1] : memref<3x16x128xf32, #tpu.memory_space<vmem>>, vector<1x16x128xf32>
    %1 = vector.shape_cast %0 : vector<1x16x128xf32> to vector<16x128xf32>
    %c0_2 = arith.constant 0 : index
    %2 = memref.load %arg1[%c0_2] : memref<3xf32, #tpu.memory_space<smem>>
    %3 = vector.broadcast %2 : f32 to vector<16x128xf32>
    %4 = arith.subf %1, %3 : vector<16x128xf32>
    %c1 = arith.constant 1 : index
    %c0_3 = arith.constant 0 : index
    %c0_4 = arith.constant 0 : index
    %5 = vector.load %arg2[%c1, %c0_3, %c0_4] : memref<3x16x128xf32, #tpu.memory_space<vmem>>, vector<1x16x128xf32>
    %6 = vector.shape_cast %5 : vector<1x16x128xf32> to vector<16x128xf32>
    %c1_5 = arith.constant 1 : index
    %7 = memref.load %arg1[%c1_5] : memref<3xf32, #tpu.memory_space<smem>>
    %8 = vector.broadcast %7 : f32 to vector<16x128xf32>
    %9 = arith.subf %6, %8 : vector<16x128xf32>
    %c2 = arith.constant 2 : index
    %c0_6 = arith.constant 0 : index
    %c0_7 = arith.constant 0 : index
    %10 = vector.load %arg2[%c2, %c0_6, %c0_7] : memref<3x16x128xf32, #tpu.memory_space<vmem>>, vector<1x16x128xf32>
    %11 = vector.shape_cast %10 : vector<1x16x128xf32> to vector<16x128xf32>
    %c2_8 = arith.constant 2 : index
    %12 = memref.load %arg1[%c2_8] : memref<3xf32, #tpu.memory_space<smem>>
    %13 = vector.broadcast %12 : f32 to vector<16x128xf32>
    %14 = arith.subf %11, %13 : vector<16x128xf32>
    %c0_9 = arith.constant 0 : index
    %c0_10 = arith.constant 0 : index
    %c0_11 = arith.constant 0 : index
    %c0_12 = arith.constant 0 : index
    %15 = vector.load %arg3[%c0_9, %c0_10, %c0_11, %c0_12] : memref<3x3x16x128xf32, #tpu.memory_space<vmem>>, vector<1x1x16x128xf32>
    %16 = vector.shape_cast %15 : vector<1x1x16x128xf32> to vector<16x128xf32>
    %17 = arith.mulf %16, %4 : vector<16x128xf32>
    %c1_13 = arith.constant 1 : index
    %c0_14 = arith.constant 0 : index
    %c0_15 = arith.constant 0 : index
    %c0_16 = arith.constant 0 : index
    %18 = vector.load %arg3[%c1_13, %c0_14, %c0_15, %c0_16] : memref<3x3x16x128xf32, #tpu.memory_space<vmem>>, vector<1x1x16x128xf32>
    %19 = vector.shape_cast %18 : vector<1x1x16x128xf32> to vector<16x128xf32>
    %20 = arith.mulf %19, %9 : vector<16x128xf32>
    %21 = arith.addf %17, %20 : vector<16x128xf32>
    %c2_17 = arith.constant 2 : index
    %c0_18 = arith.constant 0 : index
    %c0_19 = arith.constant 0 : index
    %c0_20 = arith.constant 0 : index
    %22 = vector.load %arg3[%c2_17, %c0_18, %c0_19, %c0_20] : memref<3x3x16x128xf32, #tpu.memory_space<vmem>>, vector<1x1x16x128xf32>
    %23 = vector.shape_cast %22 : vector<1x1x16x128xf32> to vector<16x128xf32>
    %24 = arith.mulf %23, %14 : vector<16x128xf32>
    %25 = arith.addf %21, %24 : vector<16x128xf32>
    %c0_21 = arith.constant 0 : index
    %c1_22 = arith.constant 1 : index
    %c0_23 = arith.constant 0 : index
    %c0_24 = arith.constant 0 : index
    %26 = vector.load %arg3[%c0_21, %c1_22, %c0_23, %c0_24] : memref<3x3x16x128xf32, #tpu.memory_space<vmem>>, vector<1x1x16x128xf32>
    %27 = vector.shape_cast %26 : vector<1x1x16x128xf32> to vector<16x128xf32>
    %28 = arith.mulf %27, %4 : vector<16x128xf32>
    %c1_25 = arith.constant 1 : index
    %c1_26 = arith.constant 1 : index
    %c0_27 = arith.constant 0 : index
    %c0_28 = arith.constant 0 : index
    %29 = vector.load %arg3[%c1_25, %c1_26, %c0_27, %c0_28] : memref<3x3x16x128xf32, #tpu.memory_space<vmem>>, vector<1x1x16x128xf32>
    %30 = vector.shape_cast %29 : vector<1x1x16x128xf32> to vector<16x128xf32>
    %31 = arith.mulf %30, %9 : vector<16x128xf32>
    %32 = arith.addf %28, %31 : vector<16x128xf32>
    %c2_29 = arith.constant 2 : index
    %c1_30 = arith.constant 1 : index
    %c0_31 = arith.constant 0 : index
    %c0_32 = arith.constant 0 : index
    %33 = vector.load %arg3[%c2_29, %c1_30, %c0_31, %c0_32] : memref<3x3x16x128xf32, #tpu.memory_space<vmem>>, vector<1x1x16x128xf32>
    %34 = vector.shape_cast %33 : vector<1x1x16x128xf32> to vector<16x128xf32>
    %35 = arith.mulf %34, %14 : vector<16x128xf32>
    %36 = arith.addf %32, %35 : vector<16x128xf32>
    %c0_33 = arith.constant 0 : index
    %c2_34 = arith.constant 2 : index
    %c0_35 = arith.constant 0 : index
    %c0_36 = arith.constant 0 : index
    %37 = vector.load %arg3[%c0_33, %c2_34, %c0_35, %c0_36] : memref<3x3x16x128xf32, #tpu.memory_space<vmem>>, vector<1x1x16x128xf32>
    %38 = vector.shape_cast %37 : vector<1x1x16x128xf32> to vector<16x128xf32>
    %39 = arith.mulf %38, %4 : vector<16x128xf32>
    %c1_37 = arith.constant 1 : index
    %c2_38 = arith.constant 2 : index
    %c0_39 = arith.constant 0 : index
    %c0_40 = arith.constant 0 : index
    %40 = vector.load %arg3[%c1_37, %c2_38, %c0_39, %c0_40] : memref<3x3x16x128xf32, #tpu.memory_space<vmem>>, vector<1x1x16x128xf32>
    %41 = vector.shape_cast %40 : vector<1x1x16x128xf32> to vector<16x128xf32>
    %42 = arith.mulf %41, %9 : vector<16x128xf32>
    %43 = arith.addf %39, %42 : vector<16x128xf32>
    %c2_41 = arith.constant 2 : index
    %c2_42 = arith.constant 2 : index
    %c0_43 = arith.constant 0 : index
    %c0_44 = arith.constant 0 : index
    %44 = vector.load %arg3[%c2_41, %c2_42, %c0_43, %c0_44] : memref<3x3x16x128xf32, #tpu.memory_space<vmem>>, vector<1x1x16x128xf32>
    %45 = vector.shape_cast %44 : vector<1x1x16x128xf32> to vector<16x128xf32>
    %46 = arith.mulf %45, %14 : vector<16x128xf32>
    %47 = arith.addf %43, %46 : vector<16x128xf32>
    %48 = arith.mulf %25, %25 : vector<16x128xf32>
    %49 = arith.mulf %36, %36 : vector<16x128xf32>
    %50 = arith.addf %48, %49 : vector<16x128xf32>
    %51 = arith.mulf %47, %47 : vector<16x128xf32>
    %52 = arith.addf %50, %51 : vector<16x128xf32>
    %53 = math.sqrt %52 : vector<16x128xf32>
    %cst = arith.constant 9.99999996E-13 : f32
    %54 = vector.broadcast %cst : f32 to vector<16x128xf32>
    %55 = arith.addf %53, %54 : vector<16x128xf32>
    %56 = tpu.reciprocal %55 : vector<16x128xf32> -> vector<16x128xf32>
    %57 = arith.mulf %25, %56 : vector<16x128xf32>
    %58 = arith.mulf %36, %56 : vector<16x128xf32>
    %59 = arith.mulf %47, %56 : vector<16x128xf32>
    %cst_45 = arith.constant -0.488602519 : f32
    %60 = vector.broadcast %cst_45 : f32 to vector<16x128xf32>
    %61 = arith.mulf %60, %58 : vector<16x128xf32>
    %cst_46 = arith.constant 0.488602519 : f32
    %62 = vector.broadcast %cst_46 : f32 to vector<16x128xf32>
    %63 = arith.mulf %62, %59 : vector<16x128xf32>
    %cst_47 = arith.constant -0.488602519 : f32
    %64 = vector.broadcast %cst_47 : f32 to vector<16x128xf32>
    %65 = arith.mulf %64, %57 : vector<16x128xf32>
    %66 = arith.mulf %57, %57 : vector<16x128xf32>
    %67 = arith.mulf %58, %58 : vector<16x128xf32>
    %68 = arith.mulf %59, %59 : vector<16x128xf32>
    %69 = arith.mulf %57, %58 : vector<16x128xf32>
    %70 = arith.mulf %58, %59 : vector<16x128xf32>
    %71 = arith.mulf %57, %59 : vector<16x128xf32>
    %cst_48 = arith.constant 1.09254849 : f32
    %72 = vector.broadcast %cst_48 : f32 to vector<16x128xf32>
    %73 = arith.mulf %72, %69 : vector<16x128xf32>
    %cst_49 = arith.constant -1.09254849 : f32
    %74 = vector.broadcast %cst_49 : f32 to vector<16x128xf32>
    %75 = arith.mulf %74, %70 : vector<16x128xf32>
    %cst_50 = arith.constant 2.000000e+00 : f32
    %76 = vector.broadcast %cst_50 : f32 to vector<16x128xf32>
    %77 = arith.mulf %76, %68 : vector<16x128xf32>
    %78 = arith.subf %77, %66 : vector<16x128xf32>
    %79 = arith.subf %78, %67 : vector<16x128xf32>
    %cst_51 = arith.constant 0.31539157 : f32
    %80 = vector.broadcast %cst_51 : f32 to vector<16x128xf32>
    %81 = arith.mulf %80, %79 : vector<16x128xf32>
    %cst_52 = arith.constant -1.09254849 : f32
    %82 = vector.broadcast %cst_52 : f32 to vector<16x128xf32>
    %83 = arith.mulf %82, %71 : vector<16x128xf32>
    %84 = arith.subf %66, %67 : vector<16x128xf32>
    %cst_53 = arith.constant 0.546274245 : f32
    %85 = vector.broadcast %cst_53 : f32 to vector<16x128xf32>
    %86 = arith.mulf %85, %84 : vector<16x128xf32>
    %cst_54 = arith.constant -0.590043604 : f32
    %87 = vector.broadcast %cst_54 : f32 to vector<16x128xf32>
    %88 = arith.mulf %87, %58 : vector<16x128xf32>
    %cst_55 = arith.constant 3.000000e+00 : f32
    %89 = vector.broadcast %cst_55 : f32 to vector<16x128xf32>
    %90 = arith.mulf %89, %66 : vector<16x128xf32>
    %91 = arith.subf %90, %67 : vector<16x128xf32>
    %92 = arith.mulf %88, %91 : vector<16x128xf32>
    %cst_56 = arith.constant 2.89061141 : f32
    %93 = vector.broadcast %cst_56 : f32 to vector<16x128xf32>
    %94 = arith.mulf %93, %69 : vector<16x128xf32>
    %95 = arith.mulf %94, %59 : vector<16x128xf32>
    %cst_57 = arith.constant -0.457045794 : f32
    %96 = vector.broadcast %cst_57 : f32 to vector<16x128xf32>
    %97 = arith.mulf %96, %58 : vector<16x128xf32>
    %cst_58 = arith.constant 4.000000e+00 : f32
    %98 = vector.broadcast %cst_58 : f32 to vector<16x128xf32>
    %99 = arith.mulf %98, %68 : vector<16x128xf32>
    %100 = arith.subf %99, %66 : vector<16x128xf32>
    %101 = arith.subf %100, %67 : vector<16x128xf32>
    %102 = arith.mulf %97, %101 : vector<16x128xf32>
    %cst_59 = arith.constant 0.373176336 : f32
    %103 = vector.broadcast %cst_59 : f32 to vector<16x128xf32>
    %104 = arith.mulf %103, %59 : vector<16x128xf32>
    %cst_60 = arith.constant 2.000000e+00 : f32
    %105 = vector.broadcast %cst_60 : f32 to vector<16x128xf32>
    %106 = arith.mulf %105, %68 : vector<16x128xf32>
    %cst_61 = arith.constant 3.000000e+00 : f32
    %107 = vector.broadcast %cst_61 : f32 to vector<16x128xf32>
    %108 = arith.mulf %107, %66 : vector<16x128xf32>
    %109 = arith.subf %106, %108 : vector<16x128xf32>
    %cst_62 = arith.constant 3.000000e+00 : f32
    %110 = vector.broadcast %cst_62 : f32 to vector<16x128xf32>
    %111 = arith.mulf %110, %67 : vector<16x128xf32>
    %112 = arith.subf %109, %111 : vector<16x128xf32>
    %113 = arith.mulf %104, %112 : vector<16x128xf32>
    %cst_63 = arith.constant -0.457045794 : f32
    %114 = vector.broadcast %cst_63 : f32 to vector<16x128xf32>
    %115 = arith.mulf %114, %57 : vector<16x128xf32>
    %cst_64 = arith.constant 4.000000e+00 : f32
    %116 = vector.broadcast %cst_64 : f32 to vector<16x128xf32>
    %117 = arith.mulf %116, %68 : vector<16x128xf32>
    %118 = arith.subf %117, %66 : vector<16x128xf32>
    %119 = arith.subf %118, %67 : vector<16x128xf32>
    %120 = arith.mulf %115, %119 : vector<16x128xf32>
    %cst_65 = arith.constant 1.44530571 : f32
    %121 = vector.broadcast %cst_65 : f32 to vector<16x128xf32>
    %122 = arith.mulf %121, %59 : vector<16x128xf32>
    %123 = arith.subf %66, %67 : vector<16x128xf32>
    %124 = arith.mulf %122, %123 : vector<16x128xf32>
    %cst_66 = arith.constant -0.590043604 : f32
    %125 = vector.broadcast %cst_66 : f32 to vector<16x128xf32>
    %126 = arith.mulf %125, %57 : vector<16x128xf32>
    %cst_67 = arith.constant 3.000000e+00 : f32
    %127 = vector.broadcast %cst_67 : f32 to vector<16x128xf32>
    %128 = arith.mulf %127, %67 : vector<16x128xf32>
    %129 = arith.subf %66, %128 : vector<16x128xf32>
    %130 = arith.mulf %126, %129 : vector<16x128xf32>
    %c0_68 = arith.constant 0 : index
    %c0_69 = arith.constant 0 : index
    %c0_70 = arith.constant 0 : index
    %c0_71 = arith.constant 0 : index
    %131 = vector.load %arg4[%c0_68, %c0_69, %c0_70, %c0_71] : memref<3x16x16x128xf32, #tpu.memory_space<vmem>>, vector<1x1x16x128xf32>
    %132 = vector.shape_cast %131 : vector<1x1x16x128xf32> to vector<16x128xf32>
    %cst_72 = arith.constant 0.282094806 : f32
    %133 = vector.broadcast %cst_72 : f32 to vector<16x128xf32>
    %134 = arith.mulf %133, %132 : vector<16x128xf32>
    %c0_73 = arith.constant 0 : index
    %c1_74 = arith.constant 1 : index
    %c0_75 = arith.constant 0 : index
    %c0_76 = arith.constant 0 : index
    %135 = vector.load %arg4[%c0_73, %c1_74, %c0_75, %c0_76] : memref<3x16x16x128xf32, #tpu.memory_space<vmem>>, vector<1x1x16x128xf32>
    %136 = vector.shape_cast %135 : vector<1x1x16x128xf32> to vector<16x128xf32>
    %137 = arith.mulf %61, %136 : vector<16x128xf32>
    %138 = arith.addf %134, %137 : vector<16x128xf32>
    %c0_77 = arith.constant 0 : index
    %c2_78 = arith.constant 2 : index
    %c0_79 = arith.constant 0 : index
    %c0_80 = arith.constant 0 : index
    %139 = vector.load %arg4[%c0_77, %c2_78, %c0_79, %c0_80] : memref<3x16x16x128xf32, #tpu.memory_space<vmem>>, vector<1x1x16x128xf32>
    %140 = vector.shape_cast %139 : vector<1x1x16x128xf32> to vector<16x128xf32>
    %141 = arith.mulf %63, %140 : vector<16x128xf32>
    %142 = arith.addf %138, %141 : vector<16x128xf32>
    %c0_81 = arith.constant 0 : index
    %c3 = arith.constant 3 : index
    %c0_82 = arith.constant 0 : index
    %c0_83 = arith.constant 0 : index
    %143 = vector.load %arg4[%c0_81, %c3, %c0_82, %c0_83] : memref<3x16x16x128xf32, #tpu.memory_space<vmem>>, vector<1x1x16x128xf32>
    %144 = vector.shape_cast %143 : vector<1x1x16x128xf32> to vector<16x128xf32>
    %145 = arith.mulf %65, %144 : vector<16x128xf32>
    %146 = arith.addf %142, %145 : vector<16x128xf32>
    %c0_84 = arith.constant 0 : index
    %c4 = arith.constant 4 : index
    %c0_85 = arith.constant 0 : index
    %c0_86 = arith.constant 0 : index
    %147 = vector.load %arg4[%c0_84, %c4, %c0_85, %c0_86] : memref<3x16x16x128xf32, #tpu.memory_space<vmem>>, vector<1x1x16x128xf32>
    %148 = vector.shape_cast %147 : vector<1x1x16x128xf32> to vector<16x128xf32>
    %149 = arith.mulf %73, %148 : vector<16x128xf32>
    %150 = arith.addf %146, %149 : vector<16x128xf32>
    %c0_87 = arith.constant 0 : index
    %c5 = arith.constant 5 : index
    %c0_88 = arith.constant 0 : index
    %c0_89 = arith.constant 0 : index
    %151 = vector.load %arg4[%c0_87, %c5, %c0_88, %c0_89] : memref<3x16x16x128xf32, #tpu.memory_space<vmem>>, vector<1x1x16x128xf32>
    %152 = vector.shape_cast %151 : vector<1x1x16x128xf32> to vector<16x128xf32>
    %153 = arith.mulf %75, %152 : vector<16x128xf32>
    %154 = arith.addf %150, %153 : vector<16x128xf32>
    %c0_90 = arith.constant 0 : index
    %c6 = arith.constant 6 : index
    %c0_91 = arith.constant 0 : index
    %c0_92 = arith.constant 0 : index
    %155 = vector.load %arg4[%c0_90, %c6, %c0_91, %c0_92] : memref<3x16x16x128xf32, #tpu.memory_space<vmem>>, vector<1x1x16x128xf32>
    %156 = vector.shape_cast %155 : vector<1x1x16x128xf32> to vector<16x128xf32>
    %157 = arith.mulf %81, %156 : vector<16x128xf32>
    %158 = arith.addf %154, %157 : vector<16x128xf32>
    %c0_93 = arith.constant 0 : index
    %c7 = arith.constant 7 : index
    %c0_94 = arith.constant 0 : index
    %c0_95 = arith.constant 0 : index
    %159 = vector.load %arg4[%c0_93, %c7, %c0_94, %c0_95] : memref<3x16x16x128xf32, #tpu.memory_space<vmem>>, vector<1x1x16x128xf32>
    %160 = vector.shape_cast %159 : vector<1x1x16x128xf32> to vector<16x128xf32>
    %161 = arith.mulf %83, %160 : vector<16x128xf32>
    %162 = arith.addf %158, %161 : vector<16x128xf32>
    %c0_96 = arith.constant 0 : index
    %c8 = arith.constant 8 : index
    %c0_97 = arith.constant 0 : index
    %c0_98 = arith.constant 0 : index
    %163 = vector.load %arg4[%c0_96, %c8, %c0_97, %c0_98] : memref<3x16x16x128xf32, #tpu.memory_space<vmem>>, vector<1x1x16x128xf32>
    %164 = vector.shape_cast %163 : vector<1x1x16x128xf32> to vector<16x128xf32>
    %165 = arith.mulf %86, %164 : vector<16x128xf32>
    %166 = arith.addf %162, %165 : vector<16x128xf32>
    %c0_99 = arith.constant 0 : index
    %c9 = arith.constant 9 : index
    %c0_100 = arith.constant 0 : index
    %c0_101 = arith.constant 0 : index
    %167 = vector.load %arg4[%c0_99, %c9, %c0_100, %c0_101] : memref<3x16x16x128xf32, #tpu.memory_space<vmem>>, vector<1x1x16x128xf32>
    %168 = vector.shape_cast %167 : vector<1x1x16x128xf32> to vector<16x128xf32>
    %169 = arith.mulf %92, %168 : vector<16x128xf32>
    %170 = arith.addf %166, %169 : vector<16x128xf32>
    %c0_102 = arith.constant 0 : index
    %c10 = arith.constant 10 : index
    %c0_103 = arith.constant 0 : index
    %c0_104 = arith.constant 0 : index
    %171 = vector.load %arg4[%c0_102, %c10, %c0_103, %c0_104] : memref<3x16x16x128xf32, #tpu.memory_space<vmem>>, vector<1x1x16x128xf32>
    %172 = vector.shape_cast %171 : vector<1x1x16x128xf32> to vector<16x128xf32>
    %173 = arith.mulf %95, %172 : vector<16x128xf32>
    %174 = arith.addf %170, %173 : vector<16x128xf32>
    %c0_105 = arith.constant 0 : index
    %c11 = arith.constant 11 : index
    %c0_106 = arith.constant 0 : index
    %c0_107 = arith.constant 0 : index
    %175 = vector.load %arg4[%c0_105, %c11, %c0_106, %c0_107] : memref<3x16x16x128xf32, #tpu.memory_space<vmem>>, vector<1x1x16x128xf32>
    %176 = vector.shape_cast %175 : vector<1x1x16x128xf32> to vector<16x128xf32>
    %177 = arith.mulf %102, %176 : vector<16x128xf32>
    %178 = arith.addf %174, %177 : vector<16x128xf32>
    %c0_108 = arith.constant 0 : index
    %c12 = arith.constant 12 : index
    %c0_109 = arith.constant 0 : index
    %c0_110 = arith.constant 0 : index
    %179 = vector.load %arg4[%c0_108, %c12, %c0_109, %c0_110] : memref<3x16x16x128xf32, #tpu.memory_space<vmem>>, vector<1x1x16x128xf32>
    %180 = vector.shape_cast %179 : vector<1x1x16x128xf32> to vector<16x128xf32>
    %181 = arith.mulf %113, %180 : vector<16x128xf32>
    %182 = arith.addf %178, %181 : vector<16x128xf32>
    %c0_111 = arith.constant 0 : index
    %c13 = arith.constant 13 : index
    %c0_112 = arith.constant 0 : index
    %c0_113 = arith.constant 0 : index
    %183 = vector.load %arg4[%c0_111, %c13, %c0_112, %c0_113] : memref<3x16x16x128xf32, #tpu.memory_space<vmem>>, vector<1x1x16x128xf32>
    %184 = vector.shape_cast %183 : vector<1x1x16x128xf32> to vector<16x128xf32>
    %185 = arith.mulf %120, %184 : vector<16x128xf32>
    %186 = arith.addf %182, %185 : vector<16x128xf32>
    %c0_114 = arith.constant 0 : index
    %c14 = arith.constant 14 : index
    %c0_115 = arith.constant 0 : index
    %c0_116 = arith.constant 0 : index
    %187 = vector.load %arg4[%c0_114, %c14, %c0_115, %c0_116] : memref<3x16x16x128xf32, #tpu.memory_space<vmem>>, vector<1x1x16x128xf32>
    %188 = vector.shape_cast %187 : vector<1x1x16x128xf32> to vector<16x128xf32>
    %189 = arith.mulf %124, %188 : vector<16x128xf32>
    %190 = arith.addf %186, %189 : vector<16x128xf32>
    %c0_117 = arith.constant 0 : index
    %c15 = arith.constant 15 : index
    %c0_118 = arith.constant 0 : index
    %c0_119 = arith.constant 0 : index
    %191 = vector.load %arg4[%c0_117, %c15, %c0_118, %c0_119] : memref<3x16x16x128xf32, #tpu.memory_space<vmem>>, vector<1x1x16x128xf32>
    %192 = vector.shape_cast %191 : vector<1x1x16x128xf32> to vector<16x128xf32>
    %193 = arith.mulf %130, %192 : vector<16x128xf32>
    %194 = arith.addf %190, %193 : vector<16x128xf32>
    %cst_120 = arith.constant 5.000000e-01 : f32
    %195 = vector.broadcast %cst_120 : f32 to vector<16x128xf32>
    %196 = arith.addf %194, %195 : vector<16x128xf32>
    %cst_121 = arith.constant 0.000000e+00 : f32
    %197 = vector.broadcast %cst_121 : f32 to vector<16x128xf32>
    %198 = arith.maximumf %196, %197 : vector<16x128xf32>
    %c0_122 = arith.constant 0 : index
    %c0_123 = arith.constant 0 : index
    %c0_124 = arith.constant 0 : index
    %199 = vector.load %arg5[%c0_122, %c0_123, %c0_124] : memref<3x16x128xf32, #tpu.memory_space<vmem>>, vector<1x16x128xf32>
    %200 = vector.shape_cast %199 : vector<1x16x128xf32> to vector<16x128xf32>
    %201 = vector.shape_cast %198 : vector<16x128xf32> to vector<1x16x128xf32>
    tpu.vector_store %arg5[%c0_122, %c0_123, %c0_124], %201 {strides = array<i32>} : memref<3x16x128xf32, #tpu.memory_space<vmem>>, vector<1x16x128xf32>,
    %c1_125 = arith.constant 1 : index
    %c0_126 = arith.constant 0 : index
    %c0_127 = arith.constant 0 : index
    %c0_128 = arith.constant 0 : index
    %202 = vector.load %arg4[%c1_125, %c0_126, %c0_127, %c0_128] : memref<3x16x16x128xf32, #tpu.memory_space<vmem>>, vector<1x1x16x128xf32>
    %203 = vector.shape_cast %202 : vector<1x1x16x128xf32> to vector<16x128xf32>
    %cst_129 = arith.constant 0.282094806 : f32
    %204 = vector.broadcast %cst_129 : f32 to vector<16x128xf32>
    %205 = arith.mulf %204, %203 : vector<16x128xf32>
    %c1_130 = arith.constant 1 : index
    %c1_131 = arith.constant 1 : index
    %c0_132 = arith.constant 0 : index
    %c0_133 = arith.constant 0 : index
    %206 = vector.load %arg4[%c1_130, %c1_131, %c0_132, %c0_133] : memref<3x16x16x128xf32, #tpu.memory_space<vmem>>, vector<1x1x16x128xf32>
    %207 = vector.shape_cast %206 : vector<1x1x16x128xf32> to vector<16x128xf32>
    %208 = arith.mulf %61, %207 : vector<16x128xf32>
    %209 = arith.addf %205, %208 : vector<16x128xf32>
    %c1_134 = arith.constant 1 : index
    %c2_135 = arith.constant 2 : index
    %c0_136 = arith.constant 0 : index
    %c0_137 = arith.constant 0 : index
    %210 = vector.load %arg4[%c1_134, %c2_135, %c0_136, %c0_137] : memref<3x16x16x128xf32, #tpu.memory_space<vmem>>, vector<1x1x16x128xf32>
    %211 = vector.shape_cast %210 : vector<1x1x16x128xf32> to vector<16x128xf32>
    %212 = arith.mulf %63, %211 : vector<16x128xf32>
    %213 = arith.addf %209, %212 : vector<16x128xf32>
    %c1_138 = arith.constant 1 : index
    %c3_139 = arith.constant 3 : index
    %c0_140 = arith.constant 0 : index
    %c0_141 = arith.constant 0 : index
    %214 = vector.load %arg4[%c1_138, %c3_139, %c0_140, %c0_141] : memref<3x16x16x128xf32, #tpu.memory_space<vmem>>, vector<1x1x16x128xf32>
    %215 = vector.shape_cast %214 : vector<1x1x16x128xf32> to vector<16x128xf32>
    %216 = arith.mulf %65, %215 : vector<16x128xf32>
    %217 = arith.addf %213, %216 : vector<16x128xf32>
    %c1_142 = arith.constant 1 : index
    %c4_143 = arith.constant 4 : index
    %c0_144 = arith.constant 0 : index
    %c0_145 = arith.constant 0 : index
    %218 = vector.load %arg4[%c1_142, %c4_143, %c0_144, %c0_145] : memref<3x16x16x128xf32, #tpu.memory_space<vmem>>, vector<1x1x16x128xf32>
    %219 = vector.shape_cast %218 : vector<1x1x16x128xf32> to vector<16x128xf32>
    %220 = arith.mulf %73, %219 : vector<16x128xf32>
    %221 = arith.addf %217, %220 : vector<16x128xf32>
    %c1_146 = arith.constant 1 : index
    %c5_147 = arith.constant 5 : index
    %c0_148 = arith.constant 0 : index
    %c0_149 = arith.constant 0 : index
    %222 = vector.load %arg4[%c1_146, %c5_147, %c0_148, %c0_149] : memref<3x16x16x128xf32, #tpu.memory_space<vmem>>, vector<1x1x16x128xf32>
    %223 = vector.shape_cast %222 : vector<1x1x16x128xf32> to vector<16x128xf32>
    %224 = arith.mulf %75, %223 : vector<16x128xf32>
    %225 = arith.addf %221, %224 : vector<16x128xf32>
    %c1_150 = arith.constant 1 : index
    %c6_151 = arith.constant 6 : index
    %c0_152 = arith.constant 0 : index
    %c0_153 = arith.constant 0 : index
    %226 = vector.load %arg4[%c1_150, %c6_151, %c0_152, %c0_153] : memref<3x16x16x128xf32, #tpu.memory_space<vmem>>, vector<1x1x16x128xf32>
    %227 = vector.shape_cast %226 : vector<1x1x16x128xf32> to vector<16x128xf32>
    %228 = arith.mulf %81, %227 : vector<16x128xf32>
    %229 = arith.addf %225, %228 : vector<16x128xf32>
    %c1_154 = arith.constant 1 : index
    %c7_155 = arith.constant 7 : index
    %c0_156 = arith.constant 0 : index
    %c0_157 = arith.constant 0 : index
    %230 = vector.load %arg4[%c1_154, %c7_155, %c0_156, %c0_157] : memref<3x16x16x128xf32, #tpu.memory_space<vmem>>, vector<1x1x16x128xf32>
    %231 = vector.shape_cast %230 : vector<1x1x16x128xf32> to vector<16x128xf32>
    %232 = arith.mulf %83, %231 : vector<16x128xf32>
    %233 = arith.addf %229, %232 : vector<16x128xf32>
    %c1_158 = arith.constant 1 : index
    %c8_159 = arith.constant 8 : index
    %c0_160 = arith.constant 0 : index
    %c0_161 = arith.constant 0 : index
    %234 = vector.load %arg4[%c1_158, %c8_159, %c0_160, %c0_161] : memref<3x16x16x128xf32, #tpu.memory_space<vmem>>, vector<1x1x16x128xf32>
    %235 = vector.shape_cast %234 : vector<1x1x16x128xf32> to vector<16x128xf32>
    %236 = arith.mulf %86, %235 : vector<16x128xf32>
    %237 = arith.addf %233, %236 : vector<16x128xf32>
    %c1_162 = arith.constant 1 : index
    %c9_163 = arith.constant 9 : index
    %c0_164 = arith.constant 0 : index
    %c0_165 = arith.constant 0 : index
    %238 = vector.load %arg4[%c1_162, %c9_163, %c0_164, %c0_165] : memref<3x16x16x128xf32, #tpu.memory_space<vmem>>, vector<1x1x16x128xf32>
    %239 = vector.shape_cast %238 : vector<1x1x16x128xf32> to vector<16x128xf32>
    %240 = arith.mulf %92, %239 : vector<16x128xf32>
    %241 = arith.addf %237, %240 : vector<16x128xf32>
    %c1_166 = arith.constant 1 : index
    %c10_167 = arith.constant 10 : index
    %c0_168 = arith.constant 0 : index
    %c0_169 = arith.constant 0 : index
    %242 = vector.load %arg4[%c1_166, %c10_167, %c0_168, %c0_169] : memref<3x16x16x128xf32, #tpu.memory_space<vmem>>, vector<1x1x16x128xf32>
    %243 = vector.shape_cast %242 : vector<1x1x16x128xf32> to vector<16x128xf32>
    %244 = arith.mulf %95, %243 : vector<16x128xf32>
    %245 = arith.addf %241, %244 : vector<16x128xf32>
    %c1_170 = arith.constant 1 : index
    %c11_171 = arith.constant 11 : index
    %c0_172 = arith.constant 0 : index
    %c0_173 = arith.constant 0 : index
    %246 = vector.load %arg4[%c1_170, %c11_171, %c0_172, %c0_173] : memref<3x16x16x128xf32, #tpu.memory_space<vmem>>, vector<1x1x16x128xf32>
    %247 = vector.shape_cast %246 : vector<1x1x16x128xf32> to vector<16x128xf32>
    %248 = arith.mulf %102, %247 : vector<16x128xf32>
    %249 = arith.addf %245, %248 : vector<16x128xf32>
    %c1_174 = arith.constant 1 : index
    %c12_175 = arith.constant 12 : index
    %c0_176 = arith.constant 0 : index
    %c0_177 = arith.constant 0 : index
    %250 = vector.load %arg4[%c1_174, %c12_175, %c0_176, %c0_177] : memref<3x16x16x128xf32, #tpu.memory_space<vmem>>, vector<1x1x16x128xf32>
    %251 = vector.shape_cast %250 : vector<1x1x16x128xf32> to vector<16x128xf32>
    %252 = arith.mulf %113, %251 : vector<16x128xf32>
    %253 = arith.addf %249, %252 : vector<16x128xf32>
    %c1_178 = arith.constant 1 : index
    %c13_179 = arith.constant 13 : index
    %c0_180 = arith.constant 0 : index
    %c0_181 = arith.constant 0 : index
    %254 = vector.load %arg4[%c1_178, %c13_179, %c0_180, %c0_181] : memref<3x16x16x128xf32, #tpu.memory_space<vmem>>, vector<1x1x16x128xf32>
    %255 = vector.shape_cast %254 : vector<1x1x16x128xf32> to vector<16x128xf32>
    %256 = arith.mulf %120, %255 : vector<16x128xf32>
    %257 = arith.addf %253, %256 : vector<16x128xf32>
    %c1_182 = arith.constant 1 : index
    %c14_183 = arith.constant 14 : index
    %c0_184 = arith.constant 0 : index
    %c0_185 = arith.constant 0 : index
    %258 = vector.load %arg4[%c1_182, %c14_183, %c0_184, %c0_185] : memref<3x16x16x128xf32, #tpu.memory_space<vmem>>, vector<1x1x16x128xf32>
    %259 = vector.shape_cast %258 : vector<1x1x16x128xf32> to vector<16x128xf32>
    %260 = arith.mulf %124, %259 : vector<16x128xf32>
    %261 = arith.addf %257, %260 : vector<16x128xf32>
    %c1_186 = arith.constant 1 : index
    %c15_187 = arith.constant 15 : index
    %c0_188 = arith.constant 0 : index
    %c0_189 = arith.constant 0 : index
    %262 = vector.load %arg4[%c1_186, %c15_187, %c0_188, %c0_189] : memref<3x16x16x128xf32, #tpu.memory_space<vmem>>, vector<1x1x16x128xf32>
    %263 = vector.shape_cast %262 : vector<1x1x16x128xf32> to vector<16x128xf32>
    %264 = arith.mulf %130, %263 : vector<16x128xf32>
    %265 = arith.addf %261, %264 : vector<16x128xf32>
    %cst_190 = arith.constant 5.000000e-01 : f32
    %266 = vector.broadcast %cst_190 : f32 to vector<16x128xf32>
    %267 = arith.addf %265, %266 : vector<16x128xf32>
    %cst_191 = arith.constant 0.000000e+00 : f32
    %268 = vector.broadcast %cst_191 : f32 to vector<16x128xf32>
    %269 = arith.maximumf %267, %268 : vector<16x128xf32>
    %c1_192 = arith.constant 1 : index
    %c0_193 = arith.constant 0 : index
    %c0_194 = arith.constant 0 : index
    %270 = vector.load %arg5[%c1_192, %c0_193, %c0_194] : memref<3x16x128xf32, #tpu.memory_space<vmem>>, vector<1x16x128xf32>
    %271 = vector.shape_cast %270 : vector<1x16x128xf32> to vector<16x128xf32>
    %272 = vector.shape_cast %269 : vector<16x128xf32> to vector<1x16x128xf32>
    tpu.vector_store %arg5[%c1_192, %c0_193, %c0_194], %272 {strides = array<i32>} : memref<3x16x128xf32, #tpu.memory_space<vmem>>, vector<1x16x128xf32>,
    %c2_195 = arith.constant 2 : index
    %c0_196 = arith.constant 0 : index
    %c0_197 = arith.constant 0 : index
    %c0_198 = arith.constant 0 : index
    %273 = vector.load %arg4[%c2_195, %c0_196, %c0_197, %c0_198] : memref<3x16x16x128xf32, #tpu.memory_space<vmem>>, vector<1x1x16x128xf32>
    %274 = vector.shape_cast %273 : vector<1x1x16x128xf32> to vector<16x128xf32>
    %cst_199 = arith.constant 0.282094806 : f32
    %275 = vector.broadcast %cst_199 : f32 to vector<16x128xf32>
    %276 = arith.mulf %275, %274 : vector<16x128xf32>
    %c2_200 = arith.constant 2 : index
    %c1_201 = arith.constant 1 : index
    %c0_202 = arith.constant 0 : index
    %c0_203 = arith.constant 0 : index
    %277 = vector.load %arg4[%c2_200, %c1_201, %c0_202, %c0_203] : memref<3x16x16x128xf32, #tpu.memory_space<vmem>>, vector<1x1x16x128xf32>
    %278 = vector.shape_cast %277 : vector<1x1x16x128xf32> to vector<16x128xf32>
    %279 = arith.mulf %61, %278 : vector<16x128xf32>
    %280 = arith.addf %276, %279 : vector<16x128xf32>
    %c2_204 = arith.constant 2 : index
    %c2_205 = arith.constant 2 : index
    %c0_206 = arith.constant 0 : index
    %c0_207 = arith.constant 0 : index
    %281 = vector.load %arg4[%c2_204, %c2_205, %c0_206, %c0_207] : memref<3x16x16x128xf32, #tpu.memory_space<vmem>>, vector<1x1x16x128xf32>
    %282 = vector.shape_cast %281 : vector<1x1x16x128xf32> to vector<16x128xf32>
    %283 = arith.mulf %63, %282 : vector<16x128xf32>
    %284 = arith.addf %280, %283 : vector<16x128xf32>
    %c2_208 = arith.constant 2 : index
    %c3_209 = arith.constant 3 : index
    %c0_210 = arith.constant 0 : index
    %c0_211 = arith.constant 0 : index
    %285 = vector.load %arg4[%c2_208, %c3_209, %c0_210, %c0_211] : memref<3x16x16x128xf32, #tpu.memory_space<vmem>>, vector<1x1x16x128xf32>
    %286 = vector.shape_cast %285 : vector<1x1x16x128xf32> to vector<16x128xf32>
    %287 = arith.mulf %65, %286 : vector<16x128xf32>
    %288 = arith.addf %284, %287 : vector<16x128xf32>
    %c2_212 = arith.constant 2 : index
    %c4_213 = arith.constant 4 : index
    %c0_214 = arith.constant 0 : index
    %c0_215 = arith.constant 0 : index
    %289 = vector.load %arg4[%c2_212, %c4_213, %c0_214, %c0_215] : memref<3x16x16x128xf32, #tpu.memory_space<vmem>>, vector<1x1x16x128xf32>
    %290 = vector.shape_cast %289 : vector<1x1x16x128xf32> to vector<16x128xf32>
    %291 = arith.mulf %73, %290 : vector<16x128xf32>
    %292 = arith.addf %288, %291 : vector<16x128xf32>
    %c2_216 = arith.constant 2 : index
    %c5_217 = arith.constant 5 : index
    %c0_218 = arith.constant 0 : index
    %c0_219 = arith.constant 0 : index
    %293 = vector.load %arg4[%c2_216, %c5_217, %c0_218, %c0_219] : memref<3x16x16x128xf32, #tpu.memory_space<vmem>>, vector<1x1x16x128xf32>
    %294 = vector.shape_cast %293 : vector<1x1x16x128xf32> to vector<16x128xf32>
    %295 = arith.mulf %75, %294 : vector<16x128xf32>
    %296 = arith.addf %292, %295 : vector<16x128xf32>
    %c2_220 = arith.constant 2 : index
    %c6_221 = arith.constant 6 : index
    %c0_222 = arith.constant 0 : index
    %c0_223 = arith.constant 0 : index
    %297 = vector.load %arg4[%c2_220, %c6_221, %c0_222, %c0_223] : memref<3x16x16x128xf32, #tpu.memory_space<vmem>>, vector<1x1x16x128xf32>
    %298 = vector.shape_cast %297 : vector<1x1x16x128xf32> to vector<16x128xf32>
    %299 = arith.mulf %81, %298 : vector<16x128xf32>
    %300 = arith.addf %296, %299 : vector<16x128xf32>
    %c2_224 = arith.constant 2 : index
    %c7_225 = arith.constant 7 : index
    %c0_226 = arith.constant 0 : index
    %c0_227 = arith.constant 0 : index
    %301 = vector.load %arg4[%c2_224, %c7_225, %c0_226, %c0_227] : memref<3x16x16x128xf32, #tpu.memory_space<vmem>>, vector<1x1x16x128xf32>
    %302 = vector.shape_cast %301 : vector<1x1x16x128xf32> to vector<16x128xf32>
    %303 = arith.mulf %83, %302 : vector<16x128xf32>
    %304 = arith.addf %300, %303 : vector<16x128xf32>
    %c2_228 = arith.constant 2 : index
    %c8_229 = arith.constant 8 : index
    %c0_230 = arith.constant 0 : index
    %c0_231 = arith.constant 0 : index
    %305 = vector.load %arg4[%c2_228, %c8_229, %c0_230, %c0_231] : memref<3x16x16x128xf32, #tpu.memory_space<vmem>>, vector<1x1x16x128xf32>
    %306 = vector.shape_cast %305 : vector<1x1x16x128xf32> to vector<16x128xf32>
    %307 = arith.mulf %86, %306 : vector<16x128xf32>
    %308 = arith.addf %304, %307 : vector<16x128xf32>
    %c2_232 = arith.constant 2 : index
    %c9_233 = arith.constant 9 : index
    %c0_234 = arith.constant 0 : index
    %c0_235 = arith.constant 0 : index
    %309 = vector.load %arg4[%c2_232, %c9_233, %c0_234, %c0_235] : memref<3x16x16x128xf32, #tpu.memory_space<vmem>>, vector<1x1x16x128xf32>
    %310 = vector.shape_cast %309 : vector<1x1x16x128xf32> to vector<16x128xf32>
    %311 = arith.mulf %92, %310 : vector<16x128xf32>
    %312 = arith.addf %308, %311 : vector<16x128xf32>
    %c2_236 = arith.constant 2 : index
    %c10_237 = arith.constant 10 : index
    %c0_238 = arith.constant 0 : index
    %c0_239 = arith.constant 0 : index
    %313 = vector.load %arg4[%c2_236, %c10_237, %c0_238, %c0_239] : memref<3x16x16x128xf32, #tpu.memory_space<vmem>>, vector<1x1x16x128xf32>
    %314 = vector.shape_cast %313 : vector<1x1x16x128xf32> to vector<16x128xf32>
    %315 = arith.mulf %95, %314 : vector<16x128xf32>
    %316 = arith.addf %312, %315 : vector<16x128xf32>
    %c2_240 = arith.constant 2 : index
    %c11_241 = arith.constant 11 : index
    %c0_242 = arith.constant 0 : index
    %c0_243 = arith.constant 0 : index
    %317 = vector.load %arg4[%c2_240, %c11_241, %c0_242, %c0_243] : memref<3x16x16x128xf32, #tpu.memory_space<vmem>>, vector<1x1x16x128xf32>
    %318 = vector.shape_cast %317 : vector<1x1x16x128xf32> to vector<16x128xf32>
    %319 = arith.mulf %102, %318 : vector<16x128xf32>
    %320 = arith.addf %316, %319 : vector<16x128xf32>
    %c2_244 = arith.constant 2 : index
    %c12_245 = arith.constant 12 : index
    %c0_246 = arith.constant 0 : index
    %c0_247 = arith.constant 0 : index
    %321 = vector.load %arg4[%c2_244, %c12_245, %c0_246, %c0_247] : memref<3x16x16x128xf32, #tpu.memory_space<vmem>>, vector<1x1x16x128xf32>
    %322 = vector.shape_cast %321 : vector<1x1x16x128xf32> to vector<16x128xf32>
    %323 = arith.mulf %113, %322 : vector<16x128xf32>
    %324 = arith.addf %320, %323 : vector<16x128xf32>
    %c2_248 = arith.constant 2 : index
    %c13_249 = arith.constant 13 : index
    %c0_250 = arith.constant 0 : index
    %c0_251 = arith.constant 0 : index
    %325 = vector.load %arg4[%c2_248, %c13_249, %c0_250, %c0_251] : memref<3x16x16x128xf32, #tpu.memory_space<vmem>>, vector<1x1x16x128xf32>
    %326 = vector.shape_cast %325 : vector<1x1x16x128xf32> to vector<16x128xf32>
    %327 = arith.mulf %120, %326 : vector<16x128xf32>
    %328 = arith.addf %324, %327 : vector<16x128xf32>
    %c2_252 = arith.constant 2 : index
    %c14_253 = arith.constant 14 : index
    %c0_254 = arith.constant 0 : index
    %c0_255 = arith.constant 0 : index
    %329 = vector.load %arg4[%c2_252, %c14_253, %c0_254, %c0_255] : memref<3x16x16x128xf32, #tpu.memory_space<vmem>>, vector<1x1x16x128xf32>
    %330 = vector.shape_cast %329 : vector<1x1x16x128xf32> to vector<16x128xf32>
    %331 = arith.mulf %124, %330 : vector<16x128xf32>
    %332 = arith.addf %328, %331 : vector<16x128xf32>
    %c2_256 = arith.constant 2 : index
    %c15_257 = arith.constant 15 : index
    %c0_258 = arith.constant 0 : index
    %c0_259 = arith.constant 0 : index
    %333 = vector.load %arg4[%c2_256, %c15_257, %c0_258, %c0_259] : memref<3x16x16x128xf32, #tpu.memory_space<vmem>>, vector<1x1x16x128xf32>
    %334 = vector.shape_cast %333 : vector<1x1x16x128xf32> to vector<16x128xf32>
    %335 = arith.mulf %130, %334 : vector<16x128xf32>
    %336 = arith.addf %332, %335 : vector<16x128xf32>
    %cst_260 = arith.constant 5.000000e-01 : f32
    %337 = vector.broadcast %cst_260 : f32 to vector<16x128xf32>
    %338 = arith.addf %336, %337 : vector<16x128xf32>
    %cst_261 = arith.constant 0.000000e+00 : f32
    %339 = vector.broadcast %cst_261 : f32 to vector<16x128xf32>
    %340 = arith.maximumf %338, %339 : vector<16x128xf32>
    %c2_262 = arith.constant 2 : index
    %c0_263 = arith.constant 0 : index
    %c0_264 = arith.constant 0 : index
    %341 = vector.load %arg5[%c2_262, %c0_263, %c0_264] : memref<3x16x128xf32, #tpu.memory_space<vmem>>, vector<1x16x128xf32>
    %342 = vector.shape_cast %341 : vector<1x16x128xf32> to vector<16x128xf32>
    %343 = vector.shape_cast %340 : vector<16x128xf32> to vector<1x16x128xf32>
    tpu.vector_store %arg5[%c2_262, %c0_263, %c0_264], %343 {strides = array<i32>} : memref<3x16x128xf32, #tpu.memory_space<vmem>>, vector<1x16x128xf32>,
    return
  }
  func.func @transform_0(%arg0: i32) -> i32 {
    %c0_i32 = arith.constant 0 : i32
    %c0_i32_0 = arith.constant 0 : i32
    return %c0_i32 : i32
  }
  func.func @transform_1(%arg0: i32) -> (i32, i32, i32) {
    %c0_i32 = arith.constant 0 : i32
    %c0_i32_0 = arith.constant 0 : i32
    %c0_i32_1 = arith.constant 0 : i32
    return %c0_i32, %arg0, %c0_i32_0 : i32, i32, i32
  }
  func.func @transform_2(%arg0: i32) -> (i32, i32, i32, i32) {
    %c0_i32 = arith.constant 0 : i32
    %c0_i32_0 = arith.constant 0 : i32
    %c0_i32_1 = arith.constant 0 : i32
    %c0_i32_2 = arith.constant 0 : i32
    return %c0_i32, %c0_i32_0, %arg0, %c0_i32_1 : i32, i32, i32, i32
  }
  func.func @transform_3(%arg0: i32) -> (i32, i32, i32, i32) {
    %c0_i32 = arith.constant 0 : i32
    %c0_i32_0 = arith.constant 0 : i32
    %c0_i32_1 = arith.constant 0 : i32
    %c0_i32_2 = arith.constant 0 : i32
    return %c0_i32, %c0_i32_0, %arg0, %c0_i32_1 : i32, i32, i32, i32
  }
  func.func @transform_4(%arg0: i32) -> (i32, i32, i32) {
    %c0_i32 = arith.constant 0 : i32
    %c0_i32_0 = arith.constant 0 : i32
    %c0_i32_1 = arith.constant 0 : i32
    return %c0_i32, %arg0, %c0_i32_0 : i32, i32, i32
  }
}

</mosaic_0001>

<llo_original>
// kernel: tpu_custom_call.1
$region0: #{tpu_custom_call.1}
  #allocation0 [shape = 'u32[]', space=smem, size = 0x4, offset = 0x4, fixed_abs, tag = 'smem constant byte address 0x4 - core index']
  #allocation1 [shape = 'u32[144,128]{1,0:T(1,128)}', space=vmem, size = 0x12000, scoped, tag = 'internal scratch']
  #allocation11 [shape = 's32[]', space=sflag, size = 0x4, offset = 0, fixed_abs, tag = 'sflag constant byte address 0x0 - dummy sync flag']
  #allocation13 [shape = 's32[]', space=sflag, size = 0x4, offset = 0, fixed_abs, tag = 'sflag constant byte address 0x0 - dummy sync flag']
  #allocation15 [shape = 's32[]', space=sflag, size = 0x4, offset = 0, fixed_abs, tag = 'sflag constant byte address 0x0 - dummy sync flag']
  #allocation17 [shape = 's32[]', space=sflag, size = 0x4, offset = 0, fixed_abs, tag = 'sflag constant byte address 0x0 - dummy sync flag']
  %s0 = inlined_call_operand.hbm [shape: f32[3], index: 0, kind: input, shape index: {}]
  %s1 = inlined_call_operand.hbm [shape: f32[3,32,128], index: 1, kind: input, shape index: {}]
  %s2 = inlined_call_operand.hbm [shape: f32[3,3,32,128], index: 2, kind: input, shape index: {}]
  %s3 = inlined_call_operand.hbm [shape: f32[3,16,32,128], index: 3, kind: input, shape index: {}]
  %s4 = inlined_call_operand.hbm [shape: f32[3,32,128], index: 4, kind: output, shape index: {}]
  %s5 = sld [smem:[#allocation0]]
  $region65: #{tpu_custom_call.1} parent=0
    _
  %s7 = ssub.s32 1, %s5
  %s8 = scalar_select 0, %s7, %s5
  $region1: #{tpu_custom_call.1} parent=0
    #allocation2 [shape = 'u8[512]{0}', space=smem, size = 0x200, scoped, tag = 'input window, operand 0, single buffered']
    #allocation3 [shape = 's32[2]{0}', space=sflag, size = 0x8, scoped, tag = 'scoped memory for tpu_custom_call.1']
    #allocation4 [shape = 's32[2]{0}', space=sflag, size = 0x8, scoped, tag = 'scoped memory for tpu_custom_call.1']
    #allocation5 [shape = 's32[2]{0}', space=sflag, size = 0x8, scoped, tag = 'scoped memory for tpu_custom_call.1']
    #allocation6 [shape = 'u8[49152]{0}', space=vmem, size = 0xc000, scoped, tag = 'input window, operand 1']
    #allocation7 [shape = 'u8[147456]{0}', space=vmem, size = 0x24000, scoped, tag = 'input window, operand 2']
    #allocation8 [shape = 's32[2]{0}', space=sflag, size = 0x8, scoped, tag = 'scoped memory for tpu_custom_call.1']
    #allocation9 [shape = 'u8[786432]{0}', space=vmem, size = 0xc0000, scoped, tag = 'input window, operand 3']
    #allocation10 [shape = 'u8[49152]{0}', space=vmem, size = 0xc000, scoped, tag = 'output window, operand 0']
    %9 = vsyncpa [#allocation5], 0
    %10 = vsyncpa [#allocation3], 0
    %s11 = scalar_lea.sflag [#allocation3], 1
    %12 = vsyncpa %s11, 0
    %13 = vsyncpa [#allocation8], 0
    %s14 = scalar_lea.sflag [#allocation8], 1
    %15 = vsyncpa %s14, 0
    %16 = vsyncpa [#allocation4], 0
    %s17 = scalar_lea.sflag [#allocation4], 1
    %18 = vsyncpa %s17, 0
    loop: start=0, step=1, limit=4
    $region2: #{tpu_custom_call.1} parent=1 // loop_pre_header
      _
    $region3: #{tpu_custom_call.1} parent=1 // loop_header
      %s20 = sphi 0, %s24
      %p21 = scmp.ge.s32.totalorder %s20, 4
      %s28 = sphi 0, %s28
      %s30 = sphi 0, %s28
      %s31 = sphi 0, %s30
      %s45 = sphi 0, %s31
      %s51 = sphi 0, %s53
      %s54 = sphi 0, %s51
      %s55 = sphi 0, %s54
      %s71 = sphi 0, %s55
      %s77 = sphi 0, %s79
      %s80 = sphi 0, %s77
      %s81 = sphi 0, %s80
      %s97 = sphi 0, %s81
      %s103 = sphi 0, %s105
      %s106 = sphi 0, %s103
      %s107 = sphi 0, %s106
      %s123 = sphi 0, %s107
      %s129 = sphi 0, %s131
      %s132 = sphi 0, %s129
      %s133 = sphi 0, %s132
      %s149 = sphi 0, %s133
    $region4: #{tpu_custom_call.1} parent=1 // loop_header_branch
      %23 = sbr.rel (%p21) target = $region8
    $region5: #{tpu_custom_call.1} parent=1 // loop_body
      %s25 = ssub.s32 %s20, 1
      %s26 = ssub.s32 %s20, 2
      %s27 = sadd.s32 %s20, 1
      %s29 = sadd.s32 %s28, 1
      %p32 = scmp.eq.s32.totalorder %s20, 1
      %p33 = scmp.ne.s32.totalorder %s28, %s30
      %p34 = scmp.eq.s32.totalorder %s20, 0
      %p35 = por %p33, %p34
      %p36 = scmp.ne.s32.totalorder %s28, %s30
      %p37 = scmp.eq.s32.totalorder %s25, 1
      %p38 = por %p36, %p37
      %p39 = scmp.ne.s32.totalorder %s30, %s31
      %p40 = scmp.eq.s32.totalorder %s25, 0
      %p41 = por %p39, %p40
      %p42 = scmp.ne.s32.totalorder %s30, %s31
      %p43 = scmp.eq.s32.totalorder %s26, 1
      %p44 = por %p42, %p43
      %p46 = scmp.ne.s32.totalorder %s31, %s45
      %p47 = scmp.eq.s32.totalorder %s26, 0
      %p48 = por %p46, %p47
      %s49 = ssub.s32 %s20, %s27
      %p50 = scmp.eq.s32.totalorder %s49, 0
      %s52 = sadd.s32 %s51, 1
      %s53 = scalar_select %p50, %s51, %s52
      %p56 = pneg %p50
      %p57 = scmp.eq.s32.totalorder %s20, 1
      %p58 = por %p56, %p57
      %p59 = scmp.ne.s32.totalorder %s51, %s54
      %p60 = scmp.eq.s32.totalorder %s20, 0
      %p61 = por %p59, %p60
      %p62 = scmp.ne.s32.totalorder %s51, %s54
      %p63 = scmp.eq.s32.totalorder %s25, 1
      %p64 = por %p62, %p63
      %p65 = scmp.ne.s32.totalorder %s54, %s55
      %p66 = scmp.eq.s32.totalorder %s25, 0
      %p67 = por %p65, %p66
      %p68 = scmp.ne.s32.totalorder %s54, %s55
      %p69 = scmp.eq.s32.totalorder %s26, 1
      %p70 = por %p68, %p69
      %p72 = scmp.ne.s32.totalorder %s55, %s71
      %p73 = scmp.eq.s32.totalorder %s26, 0
      %p74 = por %p72, %p73
      %s75 = ssub.s32 %s20, %s27
      %p76 = scmp.eq.s32.totalorder %s75, 0
      %s78 = sadd.s32 %s77, 1
      %s79 = scalar_select %p76, %s77, %s78
      %p82 = pneg %p76
      %p83 = scmp.eq.s32.totalorder %s20, 1
      %p84 = por %p82, %p83
      %p85 = scmp.ne.s32.totalorder %s77, %s80
      %p86 = scmp.eq.s32.totalorder %s20, 0
      %p87 = por %p85, %p86
      %p88 = scmp.ne.s32.totalorder %s77, %s80
      %p89 = scmp.eq.s32.totalorder %s25, 1
      %p90 = por %p88, %p89
      %p91 = scmp.ne.s32.totalorder %s80, %s81
      %p92 = scmp.eq.s32.totalorder %s25, 0
      %p93 = por %p91, %p92
      %p94 = scmp.ne.s32.totalorder %s80, %s81
      %p95 = scmp.eq.s32.totalorder %s26, 1
      %p96 = por %p94, %p95
      %p98 = scmp.ne.s32.totalorder %s81, %s97
      %p99 = scmp.eq.s32.totalorder %s26, 0
      %p100 = por %p98, %p99
      %s101 = ssub.s32 %s20, %s27
      %p102 = scmp.eq.s32.totalorder %s101, 0
      %s104 = sadd.s32 %s103, 1
      %s105 = scalar_select %p102, %s103, %s104
      %p108 = pneg %p102
      %p109 = scmp.eq.s32.totalorder %s20, 1
      %p110 = por %p108, %p109
      %p111 = scmp.ne.s32.totalorder %s103, %s106
      %p112 = scmp.eq.s32.totalorder %s20, 0
      %p113 = por %p111, %p112
      %p114 = scmp.ne.s32.totalorder %s103, %s106
      %p115 = scmp.eq.s32.totalorder %s25, 1
      %p116 = por %p114, %p115
      %p117 = scmp.ne.s32.totalorder %s106, %s107
      %p118 = scmp.eq.s32.totalorder %s25, 0
      %p119 = por %p117, %p118
      %p120 = scmp.ne.s32.totalorder %s106, %s107
      %p121 = scmp.eq.s32.totalorder %s26, 1
      %p122 = por %p120, %p121
      %p124 = scmp.ne.s32.totalorder %s107, %s123
      %p125 = scmp.eq.s32.totalorder %s26, 0
      %p126 = por %p124, %p125
      %s127 = ssub.s32 %s20, %s27
      %p128 = scmp.eq.s32.totalorder %s127, 0
      %s130 = sadd.s32 %s129, 1
      %s131 = scalar_select %p128, %s129, %s130
      %p134 = pneg %p128
      %p135 = scmp.eq.s32.totalorder %s20, 1
      %p136 = por %p134, %p135
      %p137 = scmp.ne.s32.totalorder %s129, %s132
      %p138 = scmp.eq.s32.totalorder %s20, 0
      %p139 = por %p137, %p138
      %p140 = scmp.ne.s32.totalorder %s129, %s132
      %p141 = scmp.eq.s32.totalorder %s25, 1
      %p142 = por %p140, %p141
      %p143 = scmp.ne.s32.totalorder %s132, %s133
      %p144 = scmp.eq.s32.totalorder %s25, 0
      %p145 = por %p143, %p144
      %p146 = scmp.ne.s32.totalorder %s132, %s133
      %p147 = scmp.eq.s32.totalorder %s26, 1
      %p148 = por %p146, %p147
      %p150 = scmp.ne.s32.totalorder %s133, %s149
      %p151 = scmp.eq.s32.totalorder %s26, 0
      %p152 = por %p150, %p151
      %p153 = scmp.le.s32.totalorder 1, %s20
      %p154 = scmp.lt.s32.totalorder %s20, 3
      %p155 = pnand %p153, %p154
      %p156 = pneg %p155
      // Predicated region
      $region9: #{tpu_custom_call.1} parent=5 // pred_check
        _
      $region10: #{tpu_custom_call.1} parent=5 // pred_check_branch
        %158 = sbr.rel (%p155) target = $region12
      $region11: #{tpu_custom_call.1} parent=5 // pred_region
        %s159 = ssub.s32 %s20, 1
        // Predicated region
        $region13: #{tpu_custom_call.1} parent=11 // pred_check
          %p160 = pneg %p41
        $region14: #{tpu_custom_call.1} parent=11 // pred_check_branch
          %162 = sbr.rel (%p160) target = $region16
        $region15: #{tpu_custom_call.1} parent=11 // pred_region
          %s164 = ssub.s32 16, 16
          %165 = vsyncadd [#allocation5], %s164
          %168 = dma.hbm_to_smem %s0, 16, [#allocation2], [#allocation5]
        $region16: #{tpu_custom_call.1} parent=11 // pred_fallthru
          _
      $region12: #{tpu_custom_call.1} parent=5 // pred_fallthru
        _
      %p169 = scmp.lt.s32.totalorder %s20, 2
      // Predicated region
      $region17: #{tpu_custom_call.1} parent=5 // pred_check
        %p170 = pneg %p169
      $region18: #{tpu_custom_call.1} parent=5 // pred_check_branch
        %172 = sbr.rel (%p170) target = $region20
      $region19: #{tpu_custom_call.1} parent=5 // pred_region
        // Predicated region
        $region21: #{tpu_custom_call.1} parent=19 // pred_check
          %p173 = pneg %p61
        $region22: #{tpu_custom_call.1} parent=19 // pred_check_branch
          %175 = sbr.rel (%p173) target = $region24
        $region23: #{tpu_custom_call.1} parent=19 // pred_region
          #allocation12 [shape = 'u32[6]{0}', space=smem, size = 0x18, scoped, tag = 'DMA stride descriptor']
          %s176 = sand.u32 %s51, 1
          %s177 = scalar_lea.sflag [#allocation3], %s176
          %s178 = sand.u32 %s51, 1
          %s179 = smul.addr %s178, 48
          %s180 = scalar_lea.vmem [#allocation6], %s179
          %s181 = smul.u32 2, %s20
          %s183 = ssub.s32 768, 768
          %184 = vsyncadd %s177, %s183
          %s185 = smul.addr %s181, 128
          %s186 = scalar_lea.hbm %s1, %s185
          %s188 = sshll.u32 1, 14
          %s189 = sxor.u32 4294967295, %s188
          %s191 = sld [smem:[#allocation0]]
          %s192 = sadd.s32 2, %s191
          %s194 = sshll.u32 7, 26
          %s195 = sxor.u32 4294967295, %s194
          %s196 = sand.u32 0, %s195
          %s197 = sshll.u32 %s192, 26
          %s198 = sor.u32 %s196, %s197
          %s199 = sshll.u32 %s180, 4
          %s200 = int_to_ptr.vmem [resolvable:$true] %s199
          %206 = sst [smem:[#allocation12]] 512
          %s207 = scalar_lea.smem [#allocation12], 1
          %208 = sst [smem:[%s207]] 256
          %s209 = scalar_lea.smem [#allocation12], 2
          %210 = sst [smem:[%s209]] 2
          %s211 = scalar_lea.smem [#allocation12], 3
          %212 = sst [smem:[%s211]] 128
          %s213 = scalar_lea.smem [#allocation12], 4
          %214 = sst [smem:[%s213]] 128
          %s215 = scalar_lea.smem [#allocation12], 5
          %216 = sst [smem:[%s215]] 8
          %218 = dma.general %s186, 768, %s200, %s177, [#allocation11], [#allocation12], %s198, 0
        $region24: #{tpu_custom_call.1} parent=19 // pred_fallthru
          _
        // Predicated region
        $region25: #{tpu_custom_call.1} parent=19 // pred_check
          %p219 = pneg %p87
        $region26: #{tpu_custom_call.1} parent=19 // pred_check_branch
          %221 = sbr.rel (%p219) target = $region28
        $region27: #{tpu_custom_call.1} parent=19 // pred_region
          #allocation14 [shape = 'u32[6]{0}', space=smem, size = 0x18, scoped, tag = 'DMA stride descriptor']
          %s222 = sand.u32 %s20, 1
          %s223 = scalar_lea.sflag [#allocation8], %s222
          %s224 = sand.u32 %s77, 1
          %s225 = smul.addr %s224, 144
          %s226 = scalar_lea.vmem [#allocation7], %s225
          %s227 = smul.u32 2, %s20
          %s229 = ssub.s32 2304, 2304
          %230 = vsyncadd %s223, %s229
          %s231 = smul.addr %s227, 128
          %s232 = scalar_lea.hbm %s2, %s231
          %s234 = sshll.u32 1, 14
          %s235 = sxor.u32 4294967295, %s234
          %s237 = sld [smem:[#allocation0]]
          %s238 = sadd.s32 2, %s237
          %s240 = sshll.u32 7, 26
          %s241 = sxor.u32 4294967295, %s240
          %s242 = sand.u32 0, %s241
          %s243 = sshll.u32 %s238, 26
          %s244 = sor.u32 %s242, %s243
          %s245 = sshll.u32 %s226, 4
          %s246 = int_to_ptr.vmem [resolvable:$true] %s245
          %252 = sst [smem:[#allocation14]] 512
          %s253 = scalar_lea.smem [#allocation14], 1
          %254 = sst [smem:[%s253]] 256
          %s255 = scalar_lea.smem [#allocation14], 2
          %256 = sst [smem:[%s255]] 2
          %s257 = scalar_lea.smem [#allocation14], 3
          %258 = sst [smem:[%s257]] 128
          %s259 = scalar_lea.smem [#allocation14], 4
          %260 = sst [smem:[%s259]] 128
          %s261 = scalar_lea.smem [#allocation14], 5
          %262 = sst [smem:[%s261]] 8
          %264 = dma.general %s232, 2304, %s246, %s223, [#allocation13], [#allocation14], %s244, 0
        $region28: #{tpu_custom_call.1} parent=19 // pred_fallthru
          _
        // Predicated region
        $region29: #{tpu_custom_call.1} parent=19 // pred_check
          %p265 = pneg %p113
        $region30: #{tpu_custom_call.1} parent=19 // pred_check_branch
          %267 = sbr.rel (%p265) target = $region32
        $region31: #{tpu_custom_call.1} parent=19 // pred_region
          #allocation16 [shape = 'u32[6]{0}', space=smem, size = 0x18, scoped, tag = 'DMA stride descriptor']
          %s268 = sand.u32 %s20, 1
          %s269 = scalar_lea.sflag [#allocation8], %s268
          %s270 = sand.u32 %s103, 1
          %s271 = smul.addr %s270, 768
          %s272 = scalar_lea.vmem [#allocation9], %s271
          %s273 = smul.u32 2, %s20
          %s275 = ssub.s32 12288, 12288
          %276 = vsyncadd %s269, %s275
          %s277 = smul.addr %s273, 128
          %s278 = scalar_lea.hbm %s3, %s277
          %s280 = sshll.u32 1, 14
          %s281 = sxor.u32 4294967295, %s280
          %s283 = sld [smem:[#allocation0]]
          %s284 = sadd.s32 2, %s283
          %s286 = sshll.u32 7, 26
          %s287 = sxor.u32 4294967295, %s286
          %s288 = sand.u32 0, %s287
          %s289 = sshll.u32 %s284, 26
          %s290 = sor.u32 %s288, %s289
          %s291 = sshll.u32 %s272, 4
          %s292 = int_to_ptr.vmem [resolvable:$true] %s291
          %298 = sst [smem:[#allocation16]] 512
          %s299 = scalar_lea.smem [#allocation16], 1
          %300 = sst [smem:[%s299]] 256
          %s301 = scalar_lea.smem [#allocation16], 2
          %302 = sst [smem:[%s301]] 2
          %s303 = scalar_lea.smem [#allocation16], 3
          %304 = sst [smem:[%s303]] 128
          %s305 = scalar_lea.smem [#allocation16], 4
          %306 = sst [smem:[%s305]] 128
          %s307 = scalar_lea.smem [#allocation16], 5
          %308 = sst [smem:[%s307]] 8
          %310 = dma.general %s278, 12288, %s292, %s269, [#allocation15], [#allocation16], %s290, 0
        $region32: #{tpu_custom_call.1} parent=19 // pred_fallthru
          _
      $region20: #{tpu_custom_call.1} parent=5 // pred_fallthru
        _
      %p311 = scmp.le.s32.totalorder 1, %s20
      %p312 = scmp.lt.s32.totalorder %s20, 3
      %p313 = pnand %p311, %p312
      %p314 = pneg %p313
      // Predicated region
      $region33: #{tpu_custom_call.1} parent=5 // pred_check
        _
      $region34: #{tpu_custom_call.1} parent=5 // pred_check_branch
        %316 = sbr.rel (%p313) target = $region36
      $region35: #{tpu_custom_call.1} parent=5 // pred_region
        %s317 = ssub.s32 %s20, 1
        // Predicated region
        $region37: #{tpu_custom_call.1} parent=35 // pred_check
          %p318 = pneg %p41
        $region38: #{tpu_custom_call.1} parent=35 // pred_check_branch
          %320 = sbr.rel (%p318) target = $region40
        $region39: #{tpu_custom_call.1} parent=35 // pred_region
          %321 = dma.done [#allocation5], 16
        $region40: #{tpu_custom_call.1} parent=35 // pred_fallthru
          _
        %s322 = sand.u32 %s54, 1
        %s323 = scalar_lea.sflag [#allocation3], %s322
        %s324 = sand.u32 %s54, 1
        %s325 = smul.addr %s324, 48
        %s326 = scalar_lea.vmem [#allocation6], %s325
        // Predicated region
        $region41: #{tpu_custom_call.1} parent=35 // pred_check
          %p327 = pneg %p67
        $region42: #{tpu_custom_call.1} parent=35 // pred_check_branch
          %329 = sbr.rel (%p327) target = $region44
        $region43: #{tpu_custom_call.1} parent=35 // pred_region
          %330 = dma.done %s323, 768
        $region44: #{tpu_custom_call.1} parent=35 // pred_fallthru
          _
        %s331 = sand.u32 %s25, 1
        %s332 = scalar_lea.sflag [#allocation8], %s331
        %s333 = sand.u32 %s80, 1
        %s334 = smul.addr %s333, 144
        %s335 = scalar_lea.vmem [#allocation7], %s334
        // Predicated region
        $region45: #{tpu_custom_call.1} parent=35 // pred_check
          %p336 = pneg %p93
        $region46: #{tpu_custom_call.1} parent=35 // pred_check_branch
          %338 = sbr.rel (%p336) target = $region48
        $region47: #{tpu_custom_call.1} parent=35 // pred_region
          %339 = dma.done %s332, 2304
        $region48: #{tpu_custom_call.1} parent=35 // pred_fallthru
          _
        %s340 = sand.u32 %s25, 1
        %s341 = scalar_lea.sflag [#allocation8], %s340
        %s342 = sand.u32 %s106, 1
        %s343 = smul.addr %s342, 768
        %s344 = scalar_lea.vmem [#allocation9], %s343
        // Predicated region
        $region49: #{tpu_custom_call.1} parent=35 // pred_check
          %p345 = pneg %p119
        $region50: #{tpu_custom_call.1} parent=35 // pred_check_branch
          %347 = sbr.rel (%p345) target = $region52
        $region51: #{tpu_custom_call.1} parent=35 // pred_region
          %348 = dma.done %s341, 12288
        $region52: #{tpu_custom_call.1} parent=35 // pred_fallthru
          _
        %349 = sfence
        %p350 = pneg %p41
        %p351 = pneg %p38
        %s352 = sand.u32 %s54, 1
        %s353 = scalar_lea.sflag [#allocation3], %s352
        %s354 = sand.u32 %s54, 1
        %s355 = smul.addr %s354, 48
        %s356 = scalar_lea.vmem [#allocation6], %s355
        %p357 = pneg %p67
        %p358 = pneg %p64
        %s359 = sand.u32 %s25, 1
        %s360 = scalar_lea.sflag [#allocation8], %s359
        %s361 = sand.u32 %s80, 1
        %s362 = smul.addr %s361, 144
        %s363 = scalar_lea.vmem [#allocation7], %s362
        %p364 = pneg %p93
        %p365 = pneg %p90
        %s366 = sand.u32 %s25, 1
        %s367 = scalar_lea.sflag [#allocation8], %s366
        %s368 = sand.u32 %s106, 1
        %s369 = smul.addr %s368, 768
        %s370 = scalar_lea.vmem [#allocation9], %s369
        %p371 = pneg %p119
        %p372 = pneg %p116
        %p373 = pneg %p145
        %p374 = pneg %p142
        %s375 = sand.u32 %s132, 1
        %s376 = scalar_lea.sflag [#allocation4], %s375
        %s377 = sand.u32 %s132, 1
        %s378 = smul.addr %s377, 48
        %s379 = scalar_lea.vmem [#allocation10], %s378
        %s380 = smul.u32 2, %s25
        %s381 = smul.u32 2, %s25
        %s382 = smul.u32 2, %s25
        %s383 = smul.u32 2, %s25
        %v384 = vld [vmem:[%s326] sm:$0xff]
        %v385 = vld [vmem:[%s326 + $0x8] sm:$0xff]
        %s386 = sld [smem:[#allocation2]]
        %v387 = vstv %s386
        %v388 = vsub.f32 %v384, %v387
        %v389 = vsub.f32 %v385, %v387
        %s390 = scalar_lea.vmem %s326, 16 [#allocation6]
        %v391 = vld [vmem:[%s390] sm:$0xff]
        %v392 = vld [vmem:[%s390 + $0x8] sm:$0xff]
        %s393 = sld [smem:[#allocation2 + $0x1]]
        %v394 = vstv %s393
        %v395 = vsub.f32 %v391, %v394
        %v396 = vsub.f32 %v392, %v394
        %s397 = scalar_lea.vmem %s326, 32 [#allocation6]
        %v398 = vld [vmem:[%s397] sm:$0xff]
        %v399 = vld [vmem:[%s397 + $0x8] sm:$0xff]
        %s400 = sld [smem:[#allocation2 + $0x2]]
        %v401 = vstv %s400
        %v402 = vsub.f32 %v398, %v401
        %v403 = vsub.f32 %v399, %v401
        %v404 = vld [vmem:[%s335] sm:$0xff]
        %v405 = vld [vmem:[%s335 + $0x8] sm:$0xff]
        %v406 = vmul.f32 %v404, %v388
        %v407 = vmul.f32 %v405, %v389
        %s408 = scalar_lea.vmem %s335, 48 [#allocation7]
        %v409 = vld [vmem:[%s408] sm:$0xff]
        %v410 = vld [vmem:[%s408 + $0x8] sm:$0xff]
        %v411 = vmul.f32 %v409, %v395
        %v412 = vmul.f32 %v410, %v396
        %v413 = vadd.f32 %v406, %v411
        %v414 = vadd.f32 %v407, %v412
        %s415 = scalar_lea.vmem %s335, 96 [#allocation7]
        %v416 = vld [vmem:[%s415] sm:$0xff]
        %v417 = vld [vmem:[%s415 + $0x8] sm:$0xff]
        %v418 = vmul.f32 %v416, %v402
        %v419 = vmul.f32 %v417, %v403
        %v420 = vadd.f32 %v413, %v418
        %v421 = vadd.f32 %v414, %v419
        %s422 = scalar_lea.vmem %s335, 16 [#allocation7]
        %v423 = vld [vmem:[%s422] sm:$0xff]
        %v424 = vld [vmem:[%s422 + $0x8] sm:$0xff]
        %v425 = vmul.f32 %v423, %v388
        %v426 = vmul.f32 %v424, %v389
        %s427 = scalar_lea.vmem %s335, 64 [#allocation7]
        %v428 = vld [vmem:[%s427] sm:$0xff]
        %v429 = vld [vmem:[%s427 + $0x8] sm:$0xff]
        %v430 = vmul.f32 %v428, %v395
        %v431 = vmul.f32 %v429, %v396
        %v432 = vadd.f32 %v425, %v430
        %v433 = vadd.f32 %v426, %v431
        %s434 = scalar_lea.vmem %s335, 112 [#allocation7]
        %v435 = vld [vmem:[%s434] sm:$0xff]
        %v436 = vld [vmem:[%s434 + $0x8] sm:$0xff]
        %v437 = vmul.f32 %v435, %v402
        %v438 = vmul.f32 %v436, %v403
        %v439 = vadd.f32 %v432, %v437
        %v440 = vadd.f32 %v433, %v438
        %s441 = scalar_lea.vmem %s335, 32 [#allocation7]
        %v442 = vld [vmem:[%s441] sm:$0xff]
        %v443 = vld [vmem:[%s441 + $0x8] sm:$0xff]
        %v444 = vmul.f32 %v442, %v388
        %v445 = vmul.f32 %v443, %v389
        %s446 = scalar_lea.vmem %s335, 80 [#allocation7]
        %v447 = vld [vmem:[%s446] sm:$0xff]
        %v448 = vld [vmem:[%s446 + $0x8] sm:$0xff]
        %v449 = vmul.f32 %v447, %v395
        %v450 = vmul.f32 %v448, %v396
        %v451 = vadd.f32 %v444, %v449
        %v452 = vadd.f32 %v445, %v450
        %s453 = scalar_lea.vmem %s335, 128 [#allocation7]
        %v454 = vld [vmem:[%s453] sm:$0xff]
        %v455 = vld [vmem:[%s453 + $0x8] sm:$0xff]
        %v456 = vmul.f32 %v454, %v402
        %v457 = vmul.f32 %v455, %v403
        %v458 = vadd.f32 %v451, %v456
        %v459 = vadd.f32 %v452, %v457
        %v460 = vmul.f32 %v420, %v420
        %v461 = vmul.f32 %v421, %v421
        %v462 = vmul.f32 %v439, %v439
        %v463 = vmul.f32 %v440, %v440
        %v464 = vadd.f32 %v460, %v462
        %v465 = vadd.f32 %v461, %v463
        %v466 = vmul.f32 %v458, %v458
        %v467 = vmul.f32 %v459, %v459
        %v468 = vadd.f32 %v464, %v466
        %v469 = vadd.f32 %v465, %v467
        %v470 = vrsqrt.pop %v468
        %v471 = vmul.f32 %v468, %v470
        %vm472 = vcmp.eq.f32.partialorder %v468, inf
        %v473 = vsel %vm472, %v468, %v471
        %vm474 = vcmp.eq.f32.partialorder %v468, 0.0
        %v475 = vand.u32 %v468, 2147483648
        %v476 = vsel %vm474, %v475, %v473
        %v477 = vrsqrt.pop %v469
        %v478 = vmul.f32 %v469, %v477
        %vm479 = vcmp.eq.f32.partialorder %v469, inf
        %v480 = vsel %vm479, %v469, %v478
        %vm481 = vcmp.eq.f32.partialorder %v469, 0.0
        %v482 = vand.u32 %v469, 2147483648
        %v483 = vsel %vm481, %v482, %v480
        %v484 = vadd.f32 %v476, 1e-12
        %v485 = vadd.f32 %v483, 1e-12
        %v486 = vrcp.pop %v484
        %v487 = vrcp.pop %v485
        %v488 = vmul.f32 %v420, %v486
        %v489 = vmul.f32 %v421, %v487
        %v490 = vmul.f32 %v439, %v486
        %v491 = vmul.f32 %v440, %v487
        %v492 = vmul.f32 %v458, %v486
        %v493 = vmul.f32 %v459, %v487
        %v494 = vmul.f32 %v490, -0.48860252
        %v495 = vmul.f32 %v491, -0.48860252
        %v496 = vmul.f32 %v492, 0.48860252
        %v497 = vmul.f32 %v493, 0.48860252
        %v498 = vmul.f32 %v488, -0.48860252
        %v499 = vmul.f32 %v489, -0.48860252
        %v500 = vmul.f32 %v488, %v488
        %v501 = vmul.f32 %v489, %v489
        %v502 = vmul.f32 %v490, %v490
        %v503 = vmul.f32 %v491, %v491
        %v504 = vmul.f32 %v492, %v492
        %v505 = vmul.f32 %v493, %v493
        %v506 = vmul.f32 %v488, %v490
        %v507 = vmul.f32 %v489, %v491
        %v508 = vmul.f32 %v490, %v492
        %v509 = vmul.f32 %v491, %v493
        %v510 = vmul.f32 %v488, %v492
        %v511 = vmul.f32 %v489, %v493
        %v512 = vmul.f32 %v506, 1.0925485
        %v513 = vmul.f32 %v507, 1.0925485
        %v514 = vmul.f32 %v508, -1.0925485
        %v515 = vmul.f32 %v509, -1.0925485
        %v516 = vmul.f32 %v504, 2.0
        %v517 = vmul.f32 %v505, 2.0
        %v518 = vsub.f32 %v516, %v500
        %v519 = vsub.f32 %v517, %v501
        %v520 = vsub.f32 %v518, %v502
        %v521 = vsub.f32 %v519, %v503
        %v522 = vmul.f32 %v520, 0.31539157
        %v523 = vmul.f32 %v521, 0.31539157
        %v524 = vmul.f32 %v510, -1.0925485
        %v525 = vmul.f32 %v511, -1.0925485
        %v526 = vsub.f32 %v500, %v502
        %v527 = vsub.f32 %v501, %v503
        %v528 = vmul.f32 %v526, 0.54627424
        %v529 = vmul.f32 %v527, 0.54627424
        %v530 = vmul.f32 %v490, -0.5900436
        %v531 = vmul.f32 %v491, -0.5900436
        %v532 = vmul.f32 %v500, 3.0
        %v533 = vmul.f32 %v501, 3.0
        %v534 = vsub.f32 %v532, %v502
        %v535 = vsub.f32 %v533, %v503
        %v536 = vmul.f32 %v530, %v534
        %v537 = vmul.f32 %v531, %v535
        %v538 = vmul.f32 %v506, 2.8906114
        %v539 = vmul.f32 %v507, 2.8906114
        %v540 = vmul.f32 %v538, %v492
        %v541 = vmul.f32 %v539, %v493
        %v542 = vmul.f32 %v490, -0.4570458
        %v543 = vmul.f32 %v491, -0.4570458
        %v544 = vmul.f32 %v504, 4.0
        %v545 = vmul.f32 %v505, 4.0
        %v546 = vsub.f32 %v544, %v500
        %v547 = vsub.f32 %v545, %v501
        %v548 = vsub.f32 %v546, %v502
        %v549 = vsub.f32 %v547, %v503
        %v550 = vmul.f32 %v542, %v548
        %v551 = vmul.f32 %v543, %v549
        %v552 = vmul.f32 %v492, 0.37317634
        %v553 = vmul.f32 %v493, 0.37317634
        %v554 = vsub.f32 %v516, %v532
        %v555 = vsub.f32 %v517, %v533
        %v556 = vmul.f32 %v502, 3.0
        %v557 = vmul.f32 %v503, 3.0
        %v558 = vsub.f32 %v554, %v556
        %v559 = vsub.f32 %v555, %v557
        %v560 = vmul.f32 %v552, %v558
        %v561 = vmul.f32 %v553, %v559
        %v562 = vmul.f32 %v488, -0.4570458
        %v563 = vmul.f32 %v489, -0.4570458
        %v564 = vmul.f32 %v562, %v548
        %v565 = vmul.f32 %v563, %v549
        %v566 = vmul.f32 %v492, 1.4453057
        %v567 = vmul.f32 %v493, 1.4453057
        %v568 = vmul.f32 %v566, %v526
        %v569 = vmul.f32 %v567, %v527
        %v570 = vmul.f32 %v488, -0.5900436
        %v571 = vmul.f32 %v489, -0.5900436
        %v572 = vsub.f32 %v500, %v556
        %v573 = vsub.f32 %v501, %v557
        %v574 = vmul.f32 %v570, %v572
        %v575 = vmul.f32 %v571, %v573
        %v576 = vld [vmem:[%s344] sm:$0xff]
        %v577 = vld [vmem:[%s344 + $0x8] sm:$0xff]
        %v578 = vmul.f32 %v576, 0.2820948
        %v579 = vmul.f32 %v577, 0.2820948
        %s580 = scalar_lea.vmem %s344, 16 [#allocation9]
        %v581 = vld [vmem:[%s580] sm:$0xff]
        %v582 = vld [vmem:[%s580 + $0x8] sm:$0xff]
        %v583 = vmul.f32 %v494, %v581
        %v584 = vmul.f32 %v495, %v582
        %v585 = vadd.f32 %v578, %v583
        %v586 = vadd.f32 %v579, %v584
        %s587 = scalar_lea.vmem %s344, 32 [#allocation9]
        %v588 = vld [vmem:[%s587] sm:$0xff]
        %v589 = vld [vmem:[%s587 + $0x8] sm:$0xff]
        %v590 = vmul.f32 %v496, %v588
        %v591 = vmul.f32 %v497, %v589
        %v592 = vadd.f32 %v585, %v590
        %v593 = vadd.f32 %v586, %v591
        %s594 = scalar_lea.vmem %s344, 48 [#allocation9]
        %v595 = vld [vmem:[%s594] sm:$0xff]
        %v596 = vld [vmem:[%s594 + $0x8] sm:$0xff]
        %v597 = vmul.f32 %v498, %v595
        %v598 = vmul.f32 %v499, %v596
        %v599 = vadd.f32 %v592, %v597
        %v600 = vadd.f32 %v593, %v598
        %s601 = scalar_lea.vmem %s344, 64 [#allocation9]
        %v602 = vld [vmem:[%s601] sm:$0xff]
        %v603 = vld [vmem:[%s601 + $0x8] sm:$0xff]
        %v604 = vmul.f32 %v512, %v602
        %v605 = vmul.f32 %v513, %v603
        %v606 = vadd.f32 %v599, %v604
        %v607 = vadd.f32 %v600, %v605
        %s608 = scalar_lea.vmem %s344, 80 [#allocation9]
        %v609 = vld [vmem:[%s608] sm:$0xff]
        %v610 = vld [vmem:[%s608 + $0x8] sm:$0xff]
        %v611 = vmul.f32 %v514, %v609
        %v612 = vmul.f32 %v515, %v610
        %v613 = vadd.f32 %v606, %v611
        %v614 = vadd.f32 %v607, %v612
        %s615 = scalar_lea.vmem %s344, 96 [#allocation9]
        %v616 = vld [vmem:[%s615] sm:$0xff]
        %v617 = vld [vmem:[%s615 + $0x8] sm:$0xff]
        %v618 = vmul.f32 %v522, %v616
        %v619 = vmul.f32 %v523, %v617
        %v620 = vadd.f32 %v613, %v618
        %v621 = vadd.f32 %v614, %v619
        %s622 = scalar_lea.vmem %s344, 112 [#allocation9]
        %v623 = vld [vmem:[%s622] sm:$0xff]
        %v624 = vld [vmem:[%s622 + $0x8] sm:$0xff]
        %v625 = vmul.f32 %v524, %v623
        %v626 = vmul.f32 %v525, %v624
        %v627 = vadd.f32 %v620, %v625
        %v628 = vadd.f32 %v621, %v626
        %s629 = scalar_lea.vmem %s344, 128 [#allocation9]
        %v630 = vld [vmem:[%s629] sm:$0xff]
        %v631 = vld [vmem:[%s629 + $0x8] sm:$0xff]
        %v632 = vmul.f32 %v528, %v630
        %v633 = vmul.f32 %v529, %v631
        %v634 = vadd.f32 %v627, %v632
        %v635 = vadd.f32 %v628, %v633
        %s636 = scalar_lea.vmem %s344, 144 [#allocation9]
        %v637 = vld [vmem:[%s636] sm:$0xff]
        %v638 = vld [vmem:[%s636 + $0x8] sm:$0xff]
        %v639 = vmul.f32 %v536, %v637
        %v640 = vmul.f32 %v537, %v638
        %v641 = vadd.f32 %v634, %v639
        %v642 = vadd.f32 %v635, %v640
        %s643 = scalar_lea.vmem %s344, 160 [#allocation9]
        %v644 = vld [vmem:[%s643] sm:$0xff]
        %v645 = vld [vmem:[%s643 + $0x8] sm:$0xff]
        %v646 = vmul.f32 %v540, %v644
        %v647 = vmul.f32 %v541, %v645
        %v648 = vadd.f32 %v641, %v646
        %v649 = vadd.f32 %v642, %v647
        %s650 = scalar_lea.vmem %s344, 176 [#allocation9]
        %v651 = vld [vmem:[%s650] sm:$0xff]
        %v652 = vld [vmem:[%s650 + $0x8] sm:$0xff]
        %v653 = vmul.f32 %v550, %v651
        %v654 = vmul.f32 %v551, %v652
        %v655 = vadd.f32 %v648, %v653
        %v656 = vadd.f32 %v649, %v654
        %s657 = scalar_lea.vmem %s344, 192 [#allocation9]
        %v658 = vld [vmem:[%s657] sm:$0xff]
        %v659 = vld [vmem:[%s657 + $0x8] sm:$0xff]
        %v660 = vmul.f32 %v560, %v658
        %v661 = vmul.f32 %v561, %v659
        %v662 = vadd.f32 %v655, %v660
        %v663 = vadd.f32 %v656, %v661
        %s664 = scalar_lea.vmem %s344, 208 [#allocation9]
        %v665 = vld [vmem:[%s664] sm:$0xff]
        %v666 = vld [vmem:[%s664 + $0x8] sm:$0xff]
        %v667 = vmul.f32 %v564, %v665
        %v668 = vmul.f32 %v565, %v666
        %v669 = vadd.f32 %v662, %v667
        %v670 = vadd.f32 %v663, %v668
        %s671 = scalar_lea.vmem %s344, 224 [#allocation9]
        %v672 = vld [vmem:[%s671] sm:$0xff]
        %v673 = vld [vmem:[%s671 + $0x8] sm:$0xff]
        %v674 = vmul.f32 %v568, %v672
        %v675 = vmul.f32 %v569, %v673
        %v676 = vadd.f32 %v669, %v674
        %v677 = vadd.f32 %v670, %v675
        %s678 = scalar_lea.vmem %s344, 240 [#allocation9]
        %v679 = vld [vmem:[%s678] sm:$0xff]
        %v680 = vld [vmem:[%s678 + $0x8] sm:$0xff]
        %v681 = vmul.f32 %v574, %v679
        %v682 = vmul.f32 %v575, %v680
        %v683 = vadd.f32 %v676, %v681
        %v684 = vadd.f32 %v677, %v682
        %v685 = vadd.f32 %v683, 0.5
        %v686 = vadd.f32 %v684, 0.5
        %v687 = vmax.f32 %v685, 0.0
        %v688 = vmax.f32 %v686, 0.0
        %689 = vst [vmem:[%s379] sm:$0xff] %v687
        %690 = vst [vmem:[%s379 + $0x8] sm:$0xff] %v688
        %s691 = scalar_lea.vmem %s344, 256 [#allocation9]
        %v692 = vld [vmem:[%s691] sm:$0xff]
        %v693 = vld [vmem:[%s691 + $0x8] sm:$0xff]
        %v694 = vmul.f32 %v692, 0.2820948
        %v695 = vmul.f32 %v693, 0.2820948
        %s696 = scalar_lea.vmem %s344, 272 [#allocation9]
        %v697 = vld [vmem:[%s696] sm:$0xff]
        %v698 = vld [vmem:[%s696 + $0x8] sm:$0xff]
        %v699 = vmul.f32 %v494, %v697
        %v700 = vmul.f32 %v495, %v698
        %v701 = vadd.f32 %v694, %v699
        %v702 = vadd.f32 %v695, %v700
        %s703 = scalar_lea.vmem %s344, 288 [#allocation9]
        %v704 = vld [vmem:[%s703] sm:$0xff]
        %v705 = vld [vmem:[%s703 + $0x8] sm:$0xff]
        %v706 = vmul.f32 %v496, %v704
        %v707 = vmul.f32 %v497, %v705
        %v708 = vadd.f32 %v701, %v706
        %v709 = vadd.f32 %v702, %v707
        %s710 = scalar_lea.vmem %s344, 304 [#allocation9]
        %v711 = vld [vmem:[%s710] sm:$0xff]
        %v712 = vld [vmem:[%s710 + $0x8] sm:$0xff]
        %v713 = vmul.f32 %v498, %v711
        %v714 = vmul.f32 %v499, %v712
        %v715 = vadd.f32 %v708, %v713
        %v716 = vadd.f32 %v709, %v714
        %s717 = scalar_lea.vmem %s344, 320 [#allocation9]
        %v718 = vld [vmem:[%s717] sm:$0xff]
        %v719 = vld [vmem:[%s717 + $0x8] sm:$0xff]
        %v720 = vmul.f32 %v512, %v718
        %v721 = vmul.f32 %v513, %v719
        %v722 = vadd.f32 %v715, %v720
        %v723 = vadd.f32 %v716, %v721
        %s724 = scalar_lea.vmem %s344, 336 [#allocation9]
        %v725 = vld [vmem:[%s724] sm:$0xff]
        %v726 = vld [vmem:[%s724 + $0x8] sm:$0xff]
        %v727 = vmul.f32 %v514, %v725
        %v728 = vmul.f32 %v515, %v726
        %v729 = vadd.f32 %v722, %v727
        %v730 = vadd.f32 %v723, %v728
        %s731 = scalar_lea.vmem %s344, 352 [#allocation9]
        %v732 = vld [vmem:[%s731] sm:$0xff]
        %v733 = vld [vmem:[%s731 + $0x8] sm:$0xff]
        %v734 = vmul.f32 %v522, %v732
        %v735 = vmul.f32 %v523, %v733
        %v736 = vadd.f32 %v729, %v734
        %v737 = vadd.f32 %v730, %v735
        %s738 = scalar_lea.vmem %s344, 368 [#allocation9]
        %v739 = vld [vmem:[%s738] sm:$0xff]
        %v740 = vld [vmem:[%s738 + $0x8] sm:$0xff]
        %v741 = vmul.f32 %v524, %v739
        %v742 = vmul.f32 %v525, %v740
        %v743 = vadd.f32 %v736, %v741
        %v744 = vadd.f32 %v737, %v742
        %s745 = scalar_lea.vmem %s344, 384 [#allocation9]
        %v746 = vld [vmem:[%s745] sm:$0xff]
        %v747 = vld [vmem:[%s745 + $0x8] sm:$0xff]
        %v748 = vmul.f32 %v528, %v746
        %v749 = vmul.f32 %v529, %v747
        %v750 = vadd.f32 %v743, %v748
        %v751 = vadd.f32 %v744, %v749
        %s752 = scalar_lea.vmem %s344, 400 [#allocation9]
        %v753 = vld [vmem:[%s752] sm:$0xff]
        %v754 = vld [vmem:[%s752 + $0x8] sm:$0xff]
        %v755 = vmul.f32 %v536, %v753
        %v756 = vmul.f32 %v537, %v754
        %v757 = vadd.f32 %v750, %v755
        %v758 = vadd.f32 %v751, %v756
        %s759 = scalar_lea.vmem %s344, 416 [#allocation9]
        %v760 = vld [vmem:[%s759] sm:$0xff]
        %v761 = vld [vmem:[%s759 + $0x8] sm:$0xff]
        %v762 = vmul.f32 %v540, %v760
        %v763 = vmul.f32 %v541, %v761
        %v764 = vadd.f32 %v757, %v762
        %v765 = vadd.f32 %v758, %v763
        %s766 = scalar_lea.vmem %s344, 432 [#allocation9]
        %v767 = vld [vmem:[%s766] sm:$0xff]
        %v768 = vld [vmem:[%s766 + $0x8] sm:$0xff]
        %v769 = vmul.f32 %v550, %v767
        %v770 = vmul.f32 %v551, %v768
        %v771 = vadd.f32 %v764, %v769
        %v772 = vadd.f32 %v765, %v770
        %s773 = scalar_lea.vmem %s344, 448 [#allocation9]
        %v774 = vld [vmem:[%s773] sm:$0xff]
        %v775 = vld [vmem:[%s773 + $0x8] sm:$0xff]
        %v776 = vmul.f32 %v560, %v774
        %v777 = vmul.f32 %v561, %v775
        %v778 = vadd.f32 %v771, %v776
        %v779 = vadd.f32 %v772, %v777
        %s780 = scalar_lea.vmem %s344, 464 [#allocation9]
        %v781 = vld [vmem:[%s780] sm:$0xff]
        %v782 = vld [vmem:[%s780 + $0x8] sm:$0xff]
        %v783 = vmul.f32 %v564, %v781
        %v784 = vmul.f32 %v565, %v782
        %v785 = vadd.f32 %v778, %v783
        %v786 = vadd.f32 %v779, %v784
        %s787 = scalar_lea.vmem %s344, 480 [#allocation9]
        %v788 = vld [vmem:[%s787] sm:$0xff]
        %v789 = vld [vmem:[%s787 + $0x8] sm:$0xff]
        %v790 = vmul.f32 %v568, %v788
        %v791 = vmul.f32 %v569, %v789
        %v792 = vadd.f32 %v785, %v790
        %v793 = vadd.f32 %v786, %v791
        %s794 = scalar_lea.vmem %s344, 496 [#allocation9]
        %v795 = vld [vmem:[%s794] sm:$0xff]
        %v796 = vld [vmem:[%s794 + $0x8] sm:$0xff]
        %v797 = vmul.f32 %v574, %v795
        %v798 = vmul.f32 %v575, %v796
        %v799 = vadd.f32 %v792, %v797
        %v800 = vadd.f32 %v793, %v798
        %v801 = vadd.f32 %v799, 0.5
        %v802 = vadd.f32 %v800, 0.5
        %v803 = vmax.f32 %v801, 0.0
        %v804 = vmax.f32 %v802, 0.0
        %s805 = scalar_lea.vmem %s379, 16 [#allocation10]
        %806 = vst [vmem:[%s805] sm:$0xff] %v803
        %807 = vst [vmem:[%s805 + $0x8] sm:$0xff] %v804
        %s808 = scalar_lea.vmem %s344, 512 [#allocation9]
        %v809 = vld [vmem:[%s808] sm:$0xff]
        %v810 = vld [vmem:[%s808 + $0x8] sm:$0xff]
        %v811 = vmul.f32 %v809, 0.2820948
        %v812 = vmul.f32 %v810, 0.2820948
        %s813 = scalar_lea.vmem %s344, 528 [#allocation9]
        %v814 = vld [vmem:[%s813] sm:$0xff]
        %v815 = vld [vmem:[%s813 + $0x8] sm:$0xff]
        %v816 = vmul.f32 %v494, %v814
        %v817 = vmul.f32 %v495, %v815
        %v818 = vadd.f32 %v811, %v816
        %v819 = vadd.f32 %v812, %v817
        %s820 = scalar_lea.vmem %s344, 544 [#allocation9]
        %v821 = vld [vmem:[%s820] sm:$0xff]
        %v822 = vld [vmem:[%s820 + $0x8] sm:$0xff]
        %v823 = vmul.f32 %v496, %v821
        %v824 = vmul.f32 %v497, %v822
        %v825 = vadd.f32 %v818, %v823
        %v826 = vadd.f32 %v819, %v824
        %s827 = scalar_lea.vmem %s344, 560 [#allocation9]
        %v828 = vld [vmem:[%s827] sm:$0xff]
        %v829 = vld [vmem:[%s827 + $0x8] sm:$0xff]
        %v830 = vmul.f32 %v498, %v828
        %v831 = vmul.f32 %v499, %v829
        %v832 = vadd.f32 %v825, %v830
        %v833 = vadd.f32 %v826, %v831
        %s834 = scalar_lea.vmem %s344, 576 [#allocation9]
        %v835 = vld [vmem:[%s834] sm:$0xff]
        %v836 = vld [vmem:[%s834 + $0x8] sm:$0xff]
        %v837 = vmul.f32 %v512, %v835
        %v838 = vmul.f32 %v513, %v836
        %v839 = vadd.f32 %v832, %v837
        %v840 = vadd.f32 %v833, %v838
        %s841 = scalar_lea.vmem %s344, 592 [#allocation9]
        %v842 = vld [vmem:[%s841] sm:$0xff]
        %v843 = vld [vmem:[%s841 + $0x8] sm:$0xff]
        %v844 = vmul.f32 %v514, %v842
        %v845 = vmul.f32 %v515, %v843
        %v846 = vadd.f32 %v839, %v844
        %v847 = vadd.f32 %v840, %v845
        %s848 = scalar_lea.vmem %s344, 608 [#allocation9]
        %v849 = vld [vmem:[%s848] sm:$0xff]
        %v850 = vld [vmem:[%s848 + $0x8] sm:$0xff]
        %v851 = vmul.f32 %v522, %v849
        %v852 = vmul.f32 %v523, %v850
        %v853 = vadd.f32 %v846, %v851
        %v854 = vadd.f32 %v847, %v852
        %s855 = scalar_lea.vmem %s344, 624 [#allocation9]
        %v856 = vld [vmem:[%s855] sm:$0xff]
        %v857 = vld [vmem:[%s855 + $0x8] sm:$0xff]
        %v858 = vmul.f32 %v524, %v856
        %v859 = vmul.f32 %v525, %v857
        %v860 = vadd.f32 %v853, %v858
        %v861 = vadd.f32 %v854, %v859
        %s862 = scalar_lea.vmem %s344, 640 [#allocation9]
        %v863 = vld [vmem:[%s862] sm:$0xff]
        %v864 = vld [vmem:[%s862 + $0x8] sm:$0xff]
        %v865 = vmul.f32 %v528, %v863
        %v866 = vmul.f32 %v529, %v864
        %v867 = vadd.f32 %v860, %v865
        %v868 = vadd.f32 %v861, %v866
        %s869 = scalar_lea.vmem %s344, 656 [#allocation9]
        %v870 = vld [vmem:[%s869] sm:$0xff]
        %v871 = vld [vmem:[%s869 + $0x8] sm:$0xff]
        %v872 = vmul.f32 %v536, %v870
        %v873 = vmul.f32 %v537, %v871
        %v874 = vadd.f32 %v867, %v872
        %v875 = vadd.f32 %v868, %v873
        %s876 = scalar_lea.vmem %s344, 672 [#allocation9]
        %v877 = vld [vmem:[%s876] sm:$0xff]
        %v878 = vld [vmem:[%s876 + $0x8] sm:$0xff]
        %v879 = vmul.f32 %v540, %v877
        %v880 = vmul.f32 %v541, %v878
        %v881 = vadd.f32 %v874, %v879
        %v882 = vadd.f32 %v875, %v880
        %s883 = scalar_lea.vmem %s344, 688 [#allocation9]
        %v884 = vld [vmem:[%s883] sm:$0xff]
        %v885 = vld [vmem:[%s883 + $0x8] sm:$0xff]
        %v886 = vmul.f32 %v550, %v884
        %v887 = vmul.f32 %v551, %v885
        %v888 = vadd.f32 %v881, %v886
        %v889 = vadd.f32 %v882, %v887
        %s890 = scalar_lea.vmem %s344, 704 [#allocation9]
        %v891 = vld [vmem:[%s890] sm:$0xff]
        %v892 = vld [vmem:[%s890 + $0x8] sm:$0xff]
        %v893 = vmul.f32 %v560, %v891
        %v894 = vmul.f32 %v561, %v892
        %v895 = vadd.f32 %v888, %v893
        %v896 = vadd.f32 %v889, %v894
        %s897 = scalar_lea.vmem %s344, 720 [#allocation9]
        %v898 = vld [vmem:[%s897] sm:$0xff]
        %v899 = vld [vmem:[%s897 + $0x8] sm:$0xff]
        %v900 = vmul.f32 %v564, %v898
        %v901 = vmul.f32 %v565, %v899
        %v902 = vadd.f32 %v895, %v900
        %v903 = vadd.f32 %v896, %v901
        %s904 = scalar_lea.vmem %s344, 736 [#allocation9]
        %v905 = vld [vmem:[%s904] sm:$0xff]
        %v906 = vld [vmem:[%s904 + $0x8] sm:$0xff]
        %v907 = vmul.f32 %v568, %v905
        %v908 = vmul.f32 %v569, %v906
        %v909 = vadd.f32 %v902, %v907
        %v910 = vadd.f32 %v903, %v908
        %s911 = scalar_lea.vmem %s344, 752 [#allocation9]
        %v912 = vld [vmem:[%s911] sm:$0xff]
        %v913 = vld [vmem:[%s911 + $0x8] sm:$0xff]
        %v914 = vmul.f32 %v574, %v912
        %v915 = vmul.f32 %v575, %v913
        %v916 = vadd.f32 %v909, %v914
        %v917 = vadd.f32 %v910, %v915
        %v918 = vadd.f32 %v916, 0.5
        %v919 = vadd.f32 %v917, 0.5
        %v920 = vmax.f32 %v918, 0.0
        %v921 = vmax.f32 %v919, 0.0
        %s922 = scalar_lea.vmem %s379, 32 [#allocation10]
        %923 = vst [vmem:[%s922] sm:$0xff] %v920
        %924 = vst [vmem:[%s922 + $0x8] sm:$0xff] %v921
        %s925 = sand.u32 %s132, 1
        %s926 = scalar_lea.sflag [#allocation4], %s925
        %s927 = sand.u32 %s132, 1
        %s928 = smul.addr %s927, 48
        %s929 = scalar_lea.vmem [#allocation10], %s928
        // Predicated region
        $region53: #{tpu_custom_call.1} parent=35 // pred_check
          %p930 = pneg %p142
        $region54: #{tpu_custom_call.1} parent=35 // pred_check_branch
          %932 = sbr.rel (%p930) target = $region56
        $region55: #{tpu_custom_call.1} parent=35 // pred_region
          #allocation18 [shape = 'u32[6]{0}', space=smem, size = 0x18, scoped, tag = 'DMA stride descriptor']
          %s933 = smul.u32 2, %s25
          %s935 = ssub.s32 768, 768
          %936 = vsyncadd %s926, %s935
          %s937 = smul.addr %s933, 128
          %s938 = scalar_lea.hbm %s4, %s937
          %s940 = sshll.u32 1, 14
          %s941 = sxor.u32 4294967295, %s940
          %s944 = sshll.u32 7, 18
          %s945 = sxor.u32 4294967295, %s944
          %s946 = sand.u32 0, %s945
          %s948 = sor.u32 %s946, 0
          %s950 = sshll.u32 3, 24
          %s951 = sxor.u32 4294967295, %s950
          %s952 = sand.u32 %s948, %s951
          %s954 = sor.u32 %s952, 0
          %s955 = sshll.u32 %s929, 4
          %s956 = int_to_ptr.vmem [resolvable:$true] %s955
          %962 = sst [smem:[#allocation18]] 256
          %s963 = scalar_lea.smem [#allocation18], 1
          %964 = sst [smem:[%s963]] 512
          %s965 = scalar_lea.smem [#allocation18], 2
          %966 = sst [smem:[%s965]] 2
          %s967 = scalar_lea.smem [#allocation18], 3
          %968 = sst [smem:[%s967]] 128
          %s969 = scalar_lea.smem [#allocation18], 4
          %970 = sst [smem:[%s969]] 128
          %s971 = scalar_lea.smem [#allocation18], 5
          %972 = sst [smem:[%s971]] 8
          %974 = dma.general %s956, 768, %s938, %s926, [#allocation17], [#allocation18], %s954, 0
        $region56: #{tpu_custom_call.1} parent=35 // pred_fallthru
          _
      $region36: #{tpu_custom_call.1} parent=5 // pred_fallthru
        _
      %p975 = scmp.le.s32.totalorder 2, %s20
      // Predicated region
      $region57: #{tpu_custom_call.1} parent=5 // pred_check
        %p976 = pneg %p975
      $region58: #{tpu_custom_call.1} parent=5 // pred_check_branch
        %978 = sbr.rel (%p976) target = $region60
      $region59: #{tpu_custom_call.1} parent=5 // pred_region
        %s979 = ssub.s32 %s20, 2
        // Predicated region
        $region61: #{tpu_custom_call.1} parent=59 // pred_check
          %p980 = pneg %p148
        $region62: #{tpu_custom_call.1} parent=59 // pred_check_branch
          %982 = sbr.rel (%p980) target = $region64
        $region63: #{tpu_custom_call.1} parent=59 // pred_region
          %s983 = sand.u32 %s133, 1
          %s984 = scalar_lea.sflag [#allocation4], %s983
          %s985 = sand.u32 %s133, 1
          %s986 = smul.addr %s985, 48
          %s987 = scalar_lea.vmem [#allocation10], %s986
          %988 = dma.done %s984, 768
        $region64: #{tpu_custom_call.1} parent=59 // pred_fallthru
          _
      $region60: #{tpu_custom_call.1} parent=5 // pred_fallthru
        _
    $region6: #{tpu_custom_call.1} parent=1 // loop_footer
      %s24 = sadd.s32 1, %s20
    $region7: #{tpu_custom_call.1} parent=1 // loop_footer_branch
      %19 = sbr.rel target = $region3
    $region8: #{tpu_custom_call.1} parent=1 // loop_exit
      _
    %989 = vsyncpa [#allocation3], 1
    %s990 = scalar_lea.sflag [#allocation3], 1
    %991 = vsyncpa %s990, 1
    %992 = vsyncpa [#allocation8], 1
    %s993 = scalar_lea.sflag [#allocation8], 1
    %994 = vsyncpa %s993, 1
    %995 = vsyncpa [#allocation4], 1
    %s996 = scalar_lea.sflag [#allocation4], 1
    %997 = vsyncpa %s996, 1
    %998 = vsyncpa [#allocation5], 1
    %s999 = scalar_lea.sflag [#allocation5], 1
    %1000 = vsyncpa %s999, 1

</llo_original>
